<compile_context>
chip_gen: v6e
topology: v6e:2x2x1
jax: 0.10.0
libtpu: 0.0.40
codegen_flags: <defaults>
</compile_context>

<pallas_src>
import math

import jax
import jax.numpy as jnp
from jax.experimental import pallas as pl
from jax.experimental.pallas import tpu as pltpu  # noqa: F401  (TPU backend)


# ---------------------------------------------------------------------------
# Pallas kernels
# ---------------------------------------------------------------------------

def _conv_bn_relu_pool_kernel(pe_ref, po_ref, w_ref, b_ref, o_ref):
    """Fused Conv1d (im2col matmul) + folded BN + bias + ReLU + MaxPool1d(2,2).

    pe_ref/po_ref: (M, K) bf16 patches for even / odd pooled output positions
    w_ref:         (K, C_out) bf16 weight (BatchNorm already folded in)
    b_ref:         (1, C_out) f32 bias
    o_ref:         (M, C_out) bf16 = relu(max(pe@w+b, po@w+b))
    """
    w = w_ref[...]
    b = b_ref[...]
    ye = jnp.dot(pe_ref[...], w, preferred_element_type=jnp.float32) + b
    yo = jnp.dot(po_ref[...], w, preferred_element_type=jnp.float32) + b
    o_ref[...] = jnp.maximum(jnp.maximum(ye, yo), 0.0).astype(o_ref.dtype)


def _fc_heads_kernel(feat_ref, wf1_ref, bf1_ref, wf2_ref, bf2_ref,
                     wc_ref, bc_ref, wd1_ref, bd1_ref, wd2_ref, bd2_ref,
                     class_ref, domain_ref):
    """Fused fc stack + both heads; activations & weights stay VMEM-resident.

    fc:     Linear(64,100)+ReLU, Linear(100,100)+ReLU
    class:  Linear(100,class_num) + Softmax(dim=1)
    domain: Linear(100,100) + LeakyReLU(0.01) + Linear(100,2) + Softmax(dim=1)
    """

    def dense(x, w_r, b_r):
        return jnp.dot(x.astype(jnp.bfloat16), w_r[...],
                       preferred_element_type=jnp.float32) + b_r[...]

    def softmax(z):
        z = z - jnp.max(z, axis=-1, keepdims=True)
        e = jnp.exp(z)
        return e / jnp.sum(e, axis=-1, keepdims=True)

    h = jnp.maximum(dense(feat_ref[...], wf1_ref, bf1_ref), 0.0)
    h = jnp.maximum(dense(h, wf2_ref, bf2_ref), 0.0)

    class_ref[...] = softmax(dense(h, wc_ref, bc_ref))

    # ReverseLayerF is identity in the forward pass (alpha only scales grads).
    d = dense(h, wd1_ref, bd1_ref)
    d = jnp.where(d >= 0.0, d, 0.01 * d)           # PyTorch LeakyReLU default
    domain_ref[...] = softmax(dense(d, wd2_ref, bd2_ref))


# ---------------------------------------------------------------------------
# Wrappers around pallas_call
# ---------------------------------------------------------------------------

def conv_bn_relu_pool(x, w, b, *, k, stride, pad):
    """x: (B, L, C_in) channel-last. Returns (B, L_pool, C_out) bf16.

    One pallas_call per stage: Conv1d(k, stride, pad) + folded BN + bias +
    ReLU + MaxPool1d(2,2), via even/odd-position im2col patches.
    """
    B, L, Cin = x.shape
    Cout = w.shape[1]
    Lout = (L + 2 * pad - k) // stride + 1
    Lp = Lout // 2                        # MaxPool1d(2,2) drops an odd tail
    xp = jnp.pad(x, ((0, 0), (pad, pad), (0, 0))).astype(jnp.bfloat16)

    # im2col restricted to the pooled output positions: `even` covers conv
    # outputs 0,2,4,..., `odd` covers 1,3,5,...; the kernel max-reduces them.
    def patches(offset):
        step = 2 * stride
        cols = [xp[:, offset + t: offset + t + step * (Lp - 1) + 1: step, :]
                for t in range(k)]
        p = jnp.stack(cols, axis=2)       # (B, Lp, k, C_in)
        return p.reshape(B * Lp, k * Cin)

    out = pl.pallas_call(
        _conv_bn_relu_pool_kernel,
        out_shape=jax.ShapeDtypeStruct((B * Lp, Cout), jnp.bfloat16),
    )(patches(0), patches(stride),
      w.astype(jnp.bfloat16), b.reshape(1, Cout).astype(jnp.float32))
    return out.reshape(B, Lp, Cout)


def fc_and_heads(feat, p):
    B = feat.shape[0]
    class_num = p["wc"].shape[1]
    bf16 = jnp.bfloat16
    return pl.pallas_call(
        _fc_heads_kernel,
        out_shape=(jax.ShapeDtypeStruct((B, class_num), jnp.float32),
                   jax.ShapeDtypeStruct((B, 2), jnp.float32)),
    )(feat.astype(bf16),
      p["wf1"].astype(bf16), p["bf1"].reshape(1, -1),
      p["wf2"].astype(bf16), p["bf2"].reshape(1, -1),
      p["wc"].astype(bf16), p["bc"].reshape(1, -1),
      p["wd1"].astype(bf16), p["bd1"].reshape(1, -1),
      p["wd2"].astype(bf16), p["bd2"].reshape(1, -1))


# ---------------------------------------------------------------------------
# Parameter init (PyTorch-default-like uniform(+-1/sqrt(fan_in))) + BN folding
# ---------------------------------------------------------------------------

def _uniform(key, shape, fan_in):
    bound = 1.0 / math.sqrt(fan_in)
    return jax.random.uniform(key, shape, jnp.float32, -bound, bound)


def _fold_bn(w, b, gamma, beta, mean, var, eps=1e-5):
    """Fold inference-mode BatchNorm1d into the preceding conv weight/bias."""
    scale = gamma / jnp.sqrt(var + eps)
    return w * scale[None, :], (b - mean) * scale + beta


def init_params(key, C_in, class_num):
    ks = jax.random.split(key, 20)

    def conv(kw, kb, k, cin, cout):
        fan_in = k * cin
        # weight stored as (k*C_in, C_out), column order (tap, channel)
        w = _uniform(kw, (k, cin, cout), fan_in).reshape(fan_in, cout)
        b = _uniform(kb, (cout,), fan_in)
        ones, zeros = jnp.ones(cout), jnp.zeros(cout)
        return _fold_bn(w, b, ones, zeros, zeros, ones)

    p = {}
    p["w1"], p["b1"] = conv(ks[0], ks[1], 64, C_in, 16)   # Conv1d(C_in,16,k=64,s=16,p=1)
    p["w2"], p["b2"] = conv(ks[2], ks[3], 3, 16, 32)      # Conv1d(16,32,k=3,p=1)
    p["w3"], p["b3"] = conv(ks[4], ks[5], 2, 32, 64)      # Conv1d(32,64,k=2,p=1)
    p["w4"], p["b4"] = conv(ks[6], ks[7], 3, 64, 64)      # Conv1d(64,64,k=3,p=1)
    p["w5"], p["b5"] = conv(ks[8], ks[9], 3, 64, 64)      # Conv1d(64,64,k=3,p=0)
    p["wf1"], p["bf1"] = _uniform(ks[10], (64, 100), 64), _uniform(ks[11], (100,), 64)
    p["wf2"], p["bf2"] = _uniform(ks[12], (100, 100), 100), _uniform(ks[13], (100,), 100)
    p["wc"], p["bc"] = _uniform(ks[14], (100, class_num), 100), _uniform(ks[15], (class_num,), 100)
    p["wd1"], p["bd1"] = _uniform(ks[16], (100, 100), 100), _uniform(ks[17], (100,), 100)
    p["wd2"], p["bd2"] = _uniform(ks[18], (100, 2), 100), _uniform(ks[19], (2,), 100)
    return p


# ---------------------------------------------------------------------------
# Full forward pass
# ---------------------------------------------------------------------------

@jax.jit
def wdcnn2_forward(x_ncl, params, alpha):
    # alpha only scales the (negated) gradient in ReverseLayerF.backward;
    # the forward pass is the identity, so alpha is unused here.
    del alpha
    p = params
    x = jnp.transpose(x_ncl, (0, 2, 1))                               # (B, L, C_in)
    x = conv_bn_relu_pool(x, p["w1"], p["b1"], k=64, stride=16, pad=1)  # (B, 30, 16)
    x = conv_bn_relu_pool(x, p["w2"], p["b2"], k=3, stride=1, pad=1)    # (B, 15, 32)
    x = conv_bn_relu_pool(x, p["w3"], p["b3"], k=2, stride=1, pad=1)    # (B,  8, 64)
    x = conv_bn_relu_pool(x, p["w4"], p["b4"], k=3, stride=1, pad=1)    # (B,  4, 64)
    x = conv_bn_relu_pool(x, p["w5"], p["b5"], k=3, stride=1, pad=0)    # (B,  1, 64)
    # PyTorch net output is (B, 64, 1) and x.view(B, -1) gives (B, 64);
    # here the final length is 1 so reshaping (B, 1, 64) matches exactly.
    feat = x.reshape(x.shape[0], -1)                                   # (B, 64)
    class_output, domain_out = fc_and_heads(feat, p)
    return class_output, domain_out


# ---------------------------------------------------------------------------

if __name__ == "__main__":
    B, C_in, L, class_num = 2, 1, 1024, 10
    key = jax.random.PRNGKey(0)
    k_param, k_x = jax.random.split(key)

    params = init_params(k_param, C_in, class_num)
    # The fc stack hard-codes in_features=64, so the conv/pool pyramid must end
    # with length 1; L=1024 (any L in [1006, 1517]) satisfies that.
    x = jax.random.normal(k_x, (B, C_in, L), jnp.float32)
    alpha = jnp.float32(0.5)

    class_out, domain_out = wdcnn2_forward(x, params, alpha)
    class_out, domain_out = jax.block_until_ready((class_out, domain_out))

    assert class_out.shape == (B, class_num), class_out.shape
    assert domain_out.shape == (B, 2), domain_out.shape
    # Softmax rows must be non-negative and sum (approximately) to 1.
    assert jnp.allclose(jnp.sum(class_out, axis=1), 1.0, atol=1e-4)
    assert jnp.allclose(jnp.sum(domain_out, axis=1), 1.0, atol=1e-4)
    assert bool(jnp.all(class_out >= 0.0)) and bool(jnp.all(domain_out >= 0.0))
    print("KERNEL_OK")
</pallas_src>

<mosaic_0001>
module attributes {stable_mosaic.version = 11 : i64} {
  func.func @_conv_bn_relu_pool_kernel(%arg0: memref<60x64xbf16, #tpu.memory_space<vmem>>, %arg1: memref<60x64xbf16, #tpu.memory_space<vmem>>, %arg2: memref<64x16xbf16, #tpu.memory_space<vmem>>, %arg3: memref<1x16xf32, #tpu.memory_space<vmem>>, %arg4: memref<60x16xbf16, #tpu.memory_space<vmem>>) attributes {dimension_semantics = [], scalar_prefetch = 0 : i64, scratch_operands = 0 : i64, tpu.core_type = #tpu.core_type<tc>} {
    %c0 = arith.constant 0 : index
    %c0_0 = arith.constant 0 : index
    %0 = vector.load %arg2[%c0, %c0_0] : memref<64x16xbf16, #tpu.memory_space<vmem>>, vector<64x16xbf16>
    %c0_1 = arith.constant 0 : index
    %c0_2 = arith.constant 0 : index
    %1 = vector.load %arg3[%c0_1, %c0_2] : memref<1x16xf32, #tpu.memory_space<vmem>>, vector<1x16xf32>
    %c0_3 = arith.constant 0 : index
    %c0_4 = arith.constant 0 : index
    %2 = vector.load %arg0[%c0_3, %c0_4] : memref<60x64xbf16, #tpu.memory_space<vmem>>, vector<60x64xbf16>
    %cst = arith.constant dense<0.000000e+00> : vector<60x16xf32>
    %3 = tpu.matmul %2, %0, %cst {dimension_numbers = #tpu.dot_dimension_numbers<[1], [0], [0], [1], [0, 0, 1, 1], [], []>} : vector<60x64xbf16>, vector<64x16xbf16>, vector<60x16xf32> -> vector<60x16xf32>
    %4 = vector.broadcast %1 : vector<1x16xf32> to vector<60x16xf32>
    %5 = arith.addf %3, %4 : vector<60x16xf32>
    %c0_5 = arith.constant 0 : index
    %c0_6 = arith.constant 0 : index
    %6 = vector.load %arg1[%c0_5, %c0_6] : memref<60x64xbf16, #tpu.memory_space<vmem>>, vector<60x64xbf16>
    %cst_7 = arith.constant dense<0.000000e+00> : vector<60x16xf32>
    %7 = tpu.matmul %6, %0, %cst_7 {dimension_numbers = #tpu.dot_dimension_numbers<[1], [0], [0], [1], [0, 0, 1, 1], [], []>} : vector<60x64xbf16>, vector<64x16xbf16>, vector<60x16xf32> -> vector<60x16xf32>
    %8 = vector.broadcast %1 : vector<1x16xf32> to vector<60x16xf32>
    %9 = arith.addf %7, %8 : vector<60x16xf32>
    %10 = arith.maximumf %5, %9 : vector<60x16xf32>
    %cst_8 = arith.constant 0.000000e+00 : f32
    %11 = vector.broadcast %cst_8 : f32 to vector<60x16xf32>
    %12 = arith.maximumf %10, %11 : vector<60x16xf32>
    %13 = arith.truncf %12 : vector<60x16xf32> to vector<60x16xbf16>
    %c0_9 = arith.constant 0 : index
    %c0_10 = arith.constant 0 : index
    %14 = vector.load %arg4[%c0_9, %c0_10] : memref<60x16xbf16, #tpu.memory_space<vmem>>, vector<60x16xbf16>
    tpu.vector_store %arg4[%c0_9, %c0_10], %13 {strides = array<i32>} : memref<60x16xbf16, #tpu.memory_space<vmem>>, vector<60x16xbf16>,
    return
  }
}

module attributes {stable_mosaic.version = 11 : i64} {
  func.func @_conv_bn_relu_pool_kernel(%arg0: memref<30x48xbf16, #tpu.memory_space<vmem>>, %arg1: memref<30x48xbf16, #tpu.memory_space<vmem>>, %arg2: memref<48x32xbf16, #tpu.memory_space<vmem>>, %arg3: memref<1x32xf32, #tpu.memory_space<vmem>>, %arg4: memref<30x32xbf16, #tpu.memory_space<vmem>>) attributes {dimension_semantics = [], scalar_prefetch = 0 : i64, scratch_operands = 0 : i64, tpu.core_type = #tpu.core_type<tc>} {
    %c0 = arith.constant 0 : index
    %c0_0 = arith.constant 0 : index
    %0 = vector.load %arg2[%c0, %c0_0] : memref<48x32xbf16, #tpu.memory_space<vmem>>, vector<48x32xbf16>
    %c0_1 = arith.constant 0 : index
    %c0_2 = arith.constant 0 : index
    %1 = vector.load %arg3[%c0_1, %c0_2] : memref<1x32xf32, #tpu.memory_space<vmem>>, vector<1x32xf32>
    %c0_3 = arith.constant 0 : index
    %c0_4 = arith.constant 0 : index
    %2 = vector.load %arg0[%c0_3, %c0_4] : memref<30x48xbf16, #tpu.memory_space<vmem>>, vector<30x48xbf16>
    %cst = arith.constant dense<0.000000e+00> : vector<30x32xf32>
    %3 = tpu.matmul %2, %0, %cst {dimension_numbers = #tpu.dot_dimension_numbers<[1], [0], [0], [1], [0, 0, 1, 1], [], []>} : vector<30x48xbf16>, vector<48x32xbf16>, vector<30x32xf32> -> vector<30x32xf32>
    %4 = vector.broadcast %1 : vector<1x32xf32> to vector<30x32xf32>
    %5 = arith.addf %3, %4 : vector<30x32xf32>
    %c0_5 = arith.constant 0 : index
    %c0_6 = arith.constant 0 : index
    %6 = vector.load %arg1[%c0_5, %c0_6] : memref<30x48xbf16, #tpu.memory_space<vmem>>, vector<30x48xbf16>
    %cst_7 = arith.constant dense<0.000000e+00> : vector<30x32xf32>
    %7 = tpu.matmul %6, %0, %cst_7 {dimension_numbers = #tpu.dot_dimension_numbers<[1], [0], [0], [1], [0, 0, 1, 1], [], []>} : vector<30x48xbf16>, vector<48x32xbf16>, vector<30x32xf32> -> vector<30x32xf32>
    %8 = vector.broadcast %1 : vector<1x32xf32> to vector<30x32xf32>
    %9 = arith.addf %7, %8 : vector<30x32xf32>
    %10 = arith.maximumf %5, %9 : vector<30x32xf32>
    %cst_8 = arith.constant 0.000000e+00 : f32
    %11 = vector.broadcast %cst_8 : f32 to vector<30x32xf32>
    %12 = arith.maximumf %10, %11 : vector<30x32xf32>
    %13 = arith.truncf %12 : vector<30x32xf32> to vector<30x32xbf16>
    %c0_9 = arith.constant 0 : index
    %c0_10 = arith.constant 0 : index
    %14 = vector.load %arg4[%c0_9, %c0_10] : memref<30x32xbf16, #tpu.memory_space<vmem>>, vector<30x32xbf16>
    tpu.vector_store %arg4[%c0_9, %c0_10], %13 {strides = array<i32>} : memref<30x32xbf16, #tpu.memory_space<vmem>>, vector<30x32xbf16>,
    return
  }
}

module attributes {stable_mosaic.version = 11 : i64} {
  func.func @_conv_bn_relu_pool_kernel(%arg0: memref<16x64xbf16, #tpu.memory_space<vmem>>, %arg1: memref<16x64xbf16, #tpu.memory_space<vmem>>, %arg2: memref<64x64xbf16, #tpu.memory_space<vmem>>, %arg3: memref<1x64xf32, #tpu.memory_space<vmem>>, %arg4: memref<16x64xbf16, #tpu.memory_space<vmem>>) attributes {dimension_semantics = [], scalar_prefetch = 0 : i64, scratch_operands = 0 : i64, tpu.core_type = #tpu.core_type<tc>} {
    %c0 = arith.constant 0 : index
    %c0_0 = arith.constant 0 : index
    %0 = vector.load %arg2[%c0, %c0_0] : memref<64x64xbf16, #tpu.memory_space<vmem>>, vector<64x64xbf16>
    %c0_1 = arith.constant 0 : index
    %c0_2 = arith.constant 0 : index
    %1 = vector.load %arg3[%c0_1, %c0_2] : memref<1x64xf32, #tpu.memory_space<vmem>>, vector<1x64xf32>
    %c0_3 = arith.constant 0 : index
    %c0_4 = arith.constant 0 : index
    %2 = vector.load %arg0[%c0_3, %c0_4] : memref<16x64xbf16, #tpu.memory_space<vmem>>, vector<16x64xbf16>
    %cst = arith.constant dense<0.000000e+00> : vector<16x64xf32>
    %3 = tpu.matmul %2, %0, %cst {dimension_numbers = #tpu.dot_dimension_numbers<[1], [0], [0], [1], [0, 0, 1, 1], [], []>} : vector<16x64xbf16>, vector<64x64xbf16>, vector<16x64xf32> -> vector<16x64xf32>
    %4 = vector.broadcast %1 : vector<1x64xf32> to vector<16x64xf32>
    %5 = arith.addf %3, %4 : vector<16x64xf32>
    %c0_5 = arith.constant 0 : index
    %c0_6 = arith.constant 0 : index
    %6 = vector.load %arg1[%c0_5, %c0_6] : memref<16x64xbf16, #tpu.memory_space<vmem>>, vector<16x64xbf16>
    %cst_7 = arith.constant dense<0.000000e+00> : vector<16x64xf32>
    %7 = tpu.matmul %6, %0, %cst_7 {dimension_numbers = #tpu.dot_dimension_numbers<[1], [0], [0], [1], [0, 0, 1, 1], [], []>} : vector<16x64xbf16>, vector<64x64xbf16>, vector<16x64xf32> -> vector<16x64xf32>
    %8 = vector.broadcast %1 : vector<1x64xf32> to vector<16x64xf32>
    %9 = arith.addf %7, %8 : vector<16x64xf32>
    %10 = arith.maximumf %5, %9 : vector<16x64xf32>
    %cst_8 = arith.constant 0.000000e+00 : f32
    %11 = vector.broadcast %cst_8 : f32 to vector<16x64xf32>
    %12 = arith.maximumf %10, %11 : vector<16x64xf32>
    %13 = arith.truncf %12 : vector<16x64xf32> to vector<16x64xbf16>
    %c0_9 = arith.constant 0 : index
    %c0_10 = arith.constant 0 : index
    %14 = vector.load %arg4[%c0_9, %c0_10] : memref<16x64xbf16, #tpu.memory_space<vmem>>, vector<16x64xbf16>
    tpu.vector_store %arg4[%c0_9, %c0_10], %13 {strides = array<i32>} : memref<16x64xbf16, #tpu.memory_space<vmem>>, vector<16x64xbf16>,
    return
  }
}

module attributes {stable_mosaic.version = 11 : i64} {
  func.func @_conv_bn_relu_pool_kernel(%arg0: memref<8x192xbf16, #tpu.memory_space<vmem>>, %arg1: memref<8x192xbf16, #tpu.memory_space<vmem>>, %arg2: memref<192x64xbf16, #tpu.memory_space<vmem>>, %arg3: memref<1x64xf32, #tpu.memory_space<vmem>>, %arg4: memref<8x64xbf16, #tpu.memory_space<vmem>>) attributes {dimension_semantics = [], scalar_prefetch = 0 : i64, scratch_operands = 0 : i64, tpu.core_type = #tpu.core_type<tc>} {
    %c0 = arith.constant 0 : index
    %c0_0 = arith.constant 0 : index
    %0 = vector.load %arg2[%c0, %c0_0] : memref<192x64xbf16, #tpu.memory_space<vmem>>, vector<192x64xbf16>
    %c0_1 = arith.constant 0 : index
    %c0_2 = arith.constant 0 : index
    %1 = vector.load %arg3[%c0_1, %c0_2] : memref<1x64xf32, #tpu.memory_space<vmem>>, vector<1x64xf32>
    %c0_3 = arith.constant 0 : index
    %c0_4 = arith.constant 0 : index
    %2 = vector.load %arg0[%c0_3, %c0_4] : memref<8x192xbf16, #tpu.memory_space<vmem>>, vector<8x192xbf16>
    %cst = arith.constant dense<0.000000e+00> : vector<8x64xf32>
    %3 = tpu.matmul %2, %0, %cst {dimension_numbers = #tpu.dot_dimension_numbers<[1], [0], [0], [1], [0, 0, 1, 1], [], []>} : vector<8x192xbf16>, vector<192x64xbf16>, vector<8x64xf32> -> vector<8x64xf32>
    %4 = vector.broadcast %1 : vector<1x64xf32> to vector<8x64xf32>
    %5 = arith.addf %3, %4 : vector<8x64xf32>
    %c0_5 = arith.constant 0 : index
    %c0_6 = arith.constant 0 : index
    %6 = vector.load %arg1[%c0_5, %c0_6] : memref<8x192xbf16, #tpu.memory_space<vmem>>, vector<8x192xbf16>
    %cst_7 = arith.constant dense<0.000000e+00> : vector<8x64xf32>
    %7 = tpu.matmul %6, %0, %cst_7 {dimension_numbers = #tpu.dot_dimension_numbers<[1], [0], [0], [1], [0, 0, 1, 1], [], []>} : vector<8x192xbf16>, vector<192x64xbf16>, vector<8x64xf32> -> vector<8x64xf32>
    %8 = vector.broadcast %1 : vector<1x64xf32> to vector<8x64xf32>
    %9 = arith.addf %7, %8 : vector<8x64xf32>
    %10 = arith.maximumf %5, %9 : vector<8x64xf32>
    %cst_8 = arith.constant 0.000000e+00 : f32
    %11 = vector.broadcast %cst_8 : f32 to vector<8x64xf32>
    %12 = arith.maximumf %10, %11 : vector<8x64xf32>
    %13 = arith.truncf %12 : vector<8x64xf32> to vector<8x64xbf16>
    %c0_9 = arith.constant 0 : index
    %c0_10 = arith.constant 0 : index
    %14 = vector.load %arg4[%c0_9, %c0_10] : memref<8x64xbf16, #tpu.memory_space<vmem>>, vector<8x64xbf16>
    tpu.vector_store %arg4[%c0_9, %c0_10], %13 {strides = array<i32>} : memref<8x64xbf16, #tpu.memory_space<vmem>>, vector<8x64xbf16>,
    return
  }
}

module attributes {stable_mosaic.version = 11 : i64} {
  func.func @_conv_bn_relu_pool_kernel(%arg0: memref<2x192xbf16, #tpu.memory_space<vmem>>, %arg1: memref<2x192xbf16, #tpu.memory_space<vmem>>, %arg2: memref<192x64xbf16, #tpu.memory_space<vmem>>, %arg3: memref<1x64xf32, #tpu.memory_space<vmem>>, %arg4: memref<2x64xbf16, #tpu.memory_space<vmem>>) attributes {dimension_semantics = [], scalar_prefetch = 0 : i64, scratch_operands = 0 : i64, tpu.core_type = #tpu.core_type<tc>} {
    %c0 = arith.constant 0 : index
    %c0_0 = arith.constant 0 : index
    %0 = vector.load %arg2[%c0, %c0_0] : memref<192x64xbf16, #tpu.memory_space<vmem>>, vector<192x64xbf16>
    %c0_1 = arith.constant 0 : index
    %c0_2 = arith.constant 0 : index
    %1 = vector.load %arg3[%c0_1, %c0_2] : memref<1x64xf32, #tpu.memory_space<vmem>>, vector<1x64xf32>
    %c0_3 = arith.constant 0 : index
    %c0_4 = arith.constant 0 : index
    %2 = vector.load %arg0[%c0_3, %c0_4] : memref<2x192xbf16, #tpu.memory_space<vmem>>, vector<2x192xbf16>
    %cst = arith.constant dense<0.000000e+00> : vector<2x64xf32>
    %3 = tpu.matmul %2, %0, %cst {dimension_numbers = #tpu.dot_dimension_numbers<[1], [0], [0], [1], [0, 0, 1, 1], [], []>} : vector<2x192xbf16>, vector<192x64xbf16>, vector<2x64xf32> -> vector<2x64xf32>
    %4 = vector.broadcast %1 : vector<1x64xf32> to vector<2x64xf32>
    %5 = arith.addf %3, %4 : vector<2x64xf32>
    %c0_5 = arith.constant 0 : index
    %c0_6 = arith.constant 0 : index
    %6 = vector.load %arg1[%c0_5, %c0_6] : memref<2x192xbf16, #tpu.memory_space<vmem>>, vector<2x192xbf16>
    %cst_7 = arith.constant dense<0.000000e+00> : vector<2x64xf32>
    %7 = tpu.matmul %6, %0, %cst_7 {dimension_numbers = #tpu.dot_dimension_numbers<[1], [0], [0], [1], [0, 0, 1, 1], [], []>} : vector<2x192xbf16>, vector<192x64xbf16>, vector<2x64xf32> -> vector<2x64xf32>
    %8 = vector.broadcast %1 : vector<1x64xf32> to vector<2x64xf32>
    %9 = arith.addf %7, %8 : vector<2x64xf32>
    %10 = arith.maximumf %5, %9 : vector<2x64xf32>
    %cst_8 = arith.constant 0.000000e+00 : f32
    %11 = vector.broadcast %cst_8 : f32 to vector<2x64xf32>
    %12 = arith.maximumf %10, %11 : vector<2x64xf32>
    %13 = arith.truncf %12 : vector<2x64xf32> to vector<2x64xbf16>
    %c0_9 = arith.constant 0 : index
    %c0_10 = arith.constant 0 : index
    %14 = vector.load %arg4[%c0_9, %c0_10] : memref<2x64xbf16, #tpu.memory_space<vmem>>, vector<2x64xbf16>
    tpu.vector_store %arg4[%c0_9, %c0_10], %13 {strides = array<i32>} : memref<2x64xbf16, #tpu.memory_space<vmem>>, vector<2x64xbf16>,
    return
  }
}

module attributes {stable_mosaic.version = 11 : i64} {
  func.func @_fc_heads_kernel(%arg0: memref<2x64xbf16, #tpu.memory_space<vmem>>, %arg1: memref<64x100xbf16, #tpu.memory_space<vmem>>, %arg2: memref<1x100xf32, #tpu.memory_space<vmem>>, %arg3: memref<100x100xbf16, #tpu.memory_space<vmem>>, %arg4: memref<1x100xf32, #tpu.memory_space<vmem>>, %arg5: memref<100x10xbf16, #tpu.memory_space<vmem>>, %arg6: memref<1x10xf32, #tpu.memory_space<vmem>>, %arg7: memref<100x100xbf16, #tpu.memory_space<vmem>>, %arg8: memref<1x100xf32, #tpu.memory_space<vmem>>, %arg9: memref<100x2xbf16, #tpu.memory_space<vmem>>, %arg10: memref<1x2xf32, #tpu.memory_space<vmem>>, %arg11: memref<2x10xf32, #tpu.memory_space<vmem>>, %arg12: memref<2x2xf32, #tpu.memory_space<vmem>>) attributes {dimension_semantics = [], scalar_prefetch = 0 : i64, scratch_operands = 0 : i64, tpu.core_type = #tpu.core_type<tc>} {
    %c0 = arith.constant 0 : index
    %c0_0 = arith.constant 0 : index
    %0 = vector.load %arg0[%c0, %c0_0] : memref<2x64xbf16, #tpu.memory_space<vmem>>, vector<2x64xbf16>
    %c0_1 = arith.constant 0 : index
    %c0_2 = arith.constant 0 : index
    %1 = vector.load %arg1[%c0_1, %c0_2] : memref<64x100xbf16, #tpu.memory_space<vmem>>, vector<64x100xbf16>
    %cst = arith.constant dense<0.000000e+00> : vector<2x100xf32>
    %2 = tpu.matmul %0, %1, %cst {dimension_numbers = #tpu.dot_dimension_numbers<[1], [0], [0], [1], [0, 0, 1, 1], [], []>} : vector<2x64xbf16>, vector<64x100xbf16>, vector<2x100xf32> -> vector<2x100xf32>
    %c0_3 = arith.constant 0 : index
    %c0_4 = arith.constant 0 : index
    %3 = vector.load %arg2[%c0_3, %c0_4] : memref<1x100xf32, #tpu.memory_space<vmem>>, vector<1x100xf32>
    %4 = vector.broadcast %3 : vector<1x100xf32> to vector<2x100xf32>
    %5 = arith.addf %2, %4 : vector<2x100xf32>
    %cst_5 = arith.constant 0.000000e+00 : f32
    %6 = vector.broadcast %cst_5 : f32 to vector<2x100xf32>
    %7 = arith.maximumf %5, %6 : vector<2x100xf32>
    %8 = arith.truncf %7 : vector<2x100xf32> to vector<2x100xbf16>
    %c0_6 = arith.constant 0 : index
    %c0_7 = arith.constant 0 : index
    %9 = vector.load %arg3[%c0_6, %c0_7] : memref<100x100xbf16, #tpu.memory_space<vmem>>, vector<100x100xbf16>
    %cst_8 = arith.constant dense<0.000000e+00> : vector<2x100xf32>
    %10 = tpu.matmul %8, %9, %cst_8 {dimension_numbers = #tpu.dot_dimension_numbers<[1], [0], [0], [1], [0, 0, 1, 1], [], []>} : vector<2x100xbf16>, vector<100x100xbf16>, vector<2x100xf32> -> vector<2x100xf32>
    %c0_9 = arith.constant 0 : index
    %c0_10 = arith.constant 0 : index
    %11 = vector.load %arg4[%c0_9, %c0_10] : memref<1x100xf32, #tpu.memory_space<vmem>>, vector<1x100xf32>
    %12 = vector.broadcast %11 : vector<1x100xf32> to vector<2x100xf32>
    %13 = arith.addf %10, %12 : vector<2x100xf32>
    %cst_11 = arith.constant 0.000000e+00 : f32
    %14 = vector.broadcast %cst_11 : f32 to vector<2x100xf32>
    %15 = arith.maximumf %13, %14 : vector<2x100xf32>
    %16 = arith.truncf %15 : vector<2x100xf32> to vector<2x100xbf16>
    %c0_12 = arith.constant 0 : index
    %c0_13 = arith.constant 0 : index
    %17 = vector.load %arg5[%c0_12, %c0_13] : memref<100x10xbf16, #tpu.memory_space<vmem>>, vector<100x10xbf16>
    %cst_14 = arith.constant dense<0.000000e+00> : vector<2x10xf32>
    %18 = tpu.matmul %16, %17, %cst_14 {dimension_numbers = #tpu.dot_dimension_numbers<[1], [0], [0], [1], [0, 0, 1, 1], [], []>} : vector<2x100xbf16>, vector<100x10xbf16>, vector<2x10xf32> -> vector<2x10xf32>
    %c0_15 = arith.constant 0 : index
    %c0_16 = arith.constant 0 : index
    %19 = vector.load %arg6[%c0_15, %c0_16] : memref<1x10xf32, #tpu.memory_space<vmem>>, vector<1x10xf32>
    %20 = vector.broadcast %19 : vector<1x10xf32> to vector<2x10xf32>
    %21 = arith.addf %18, %20 : vector<2x10xf32>
    %cst_17 = arith.constant dense<0xFF800000> : vector<2xf32>
    %22 = vector.multi_reduction <maximumf>, %21, %cst_17 [1] : vector<2x10xf32> to vector<2xf32>
    %23 = vector.shape_cast %22 : vector<2xf32> to vector<2x1xf32>
    %24 = vector.broadcast %23 : vector<2x1xf32> to vector<2x10xf32>
    %25 = arith.subf %21, %24 : vector<2x10xf32>
    %26 = math.exp %25 : vector<2x10xf32>
    %cst_18 = arith.constant dense<0.000000e+00> : vector<2xf32>
    %27 = vector.multi_reduction <add>, %26, %cst_18 [1] : vector<2x10xf32> to vector<2xf32>
    %28 = vector.shape_cast %27 : vector<2xf32> to vector<2x1xf32>
    %29 = vector.broadcast %28 : vector<2x1xf32> to vector<2x10xf32>
    %30 = arith.divf %26, %29 : vector<2x10xf32>
    %c0_19 = arith.constant 0 : index
    %c0_20 = arith.constant 0 : index
    %31 = vector.load %arg11[%c0_19, %c0_20] : memref<2x10xf32, #tpu.memory_space<vmem>>, vector<2x10xf32>
    tpu.vector_store %arg11[%c0_19, %c0_20], %30 {strides = array<i32>} : memref<2x10xf32, #tpu.memory_space<vmem>>, vector<2x10xf32>,
    %32 = arith.truncf %15 : vector<2x100xf32> to vector<2x100xbf16>
    %c0_21 = arith.constant 0 : index
    %c0_22 = arith.constant 0 : index
    %33 = vector.load %arg7[%c0_21, %c0_22] : memref<100x100xbf16, #tpu.memory_space<vmem>>, vector<100x100xbf16>
    %cst_23 = arith.constant dense<0.000000e+00> : vector<2x100xf32>
    %34 = tpu.matmul %32, %33, %cst_23 {dimension_numbers = #tpu.dot_dimension_numbers<[1], [0], [0], [1], [0, 0, 1, 1], [], []>} : vector<2x100xbf16>, vector<100x100xbf16>, vector<2x100xf32> -> vector<2x100xf32>
    %c0_24 = arith.constant 0 : index
    %c0_25 = arith.constant 0 : index
    %35 = vector.load %arg8[%c0_24, %c0_25] : memref<1x100xf32, #tpu.memory_space<vmem>>, vector<1x100xf32>
    %36 = vector.broadcast %35 : vector<1x100xf32> to vector<2x100xf32>
    %37 = arith.addf %34, %36 : vector<2x100xf32>
    %cst_26 = arith.constant 0.000000e+00 : f32
    %38 = vector.broadcast %cst_26 : f32 to vector<2x100xf32>
    %39 = arith.cmpf oge, %37, %38 : vector<2x100xf32>
    %cst_27 = arith.constant 0.00999999977 : f32
    %40 = vector.broadcast %cst_27 : f32 to vector<2x100xf32>
    %41 = arith.mulf %40, %37 : vector<2x100xf32>
    %42 = arith.select %39, %37, %41 : vector<2x100xi1>, vector<2x100xf32>
    %43 = arith.truncf %42 : vector<2x100xf32> to vector<2x100xbf16>
    %c0_28 = arith.constant 0 : index
    %c0_29 = arith.constant 0 : index
    %44 = vector.load %arg9[%c0_28, %c0_29] : memref<100x2xbf16, #tpu.memory_space<vmem>>, vector<100x2xbf16>
    %cst_30 = arith.constant dense<0.000000e+00> : vector<2x2xf32>
    %45 = tpu.matmul %43, %44, %cst_30 {dimension_numbers = #tpu.dot_dimension_numbers<[1], [0], [0], [1], [0, 0, 1, 1], [], []>} : vector<2x100xbf16>, vector<100x2xbf16>, vector<2x2xf32> -> vector<2x2xf32>
    %c0_31 = arith.constant 0 : index
    %c0_32 = arith.constant 0 : index
    %46 = vector.load %arg10[%c0_31, %c0_32] : memref<1x2xf32, #tpu.memory_space<vmem>>, vector<1x2xf32>
    %47 = vector.broadcast %46 : vector<1x2xf32> to vector<2x2xf32>
    %48 = arith.addf %45, %47 : vector<2x2xf32>
    %cst_33 = arith.constant dense<0xFF800000> : vector<2xf32>
    %49 = vector.multi_reduction <maximumf>, %48, %cst_33 [1] : vector<2x2xf32> to vector<2xf32>
    %50 = vector.shape_cast %49 : vector<2xf32> to vector<2x1xf32>
    %51 = vector.broadcast %50 : vector<2x1xf32> to vector<2x2xf32>
    %52 = arith.subf %48, %51 : vector<2x2xf32>
    %53 = math.exp %52 : vector<2x2xf32>
    %cst_34 = arith.constant dense<0.000000e+00> : vector<2xf32>
    %54 = vector.multi_reduction <add>, %53, %cst_34 [1] : vector<2x2xf32> to vector<2xf32>
    %55 = vector.shape_cast %54 : vector<2xf32> to vector<2x1xf32>
    %56 = vector.broadcast %55 : vector<2x1xf32> to vector<2x2xf32>
    %57 = arith.divf %53, %56 : vector<2x2xf32>
    %c0_35 = arith.constant 0 : index
    %c0_36 = arith.constant 0 : index
    %58 = vector.load %arg12[%c0_35, %c0_36] : memref<2x2xf32, #tpu.memory_space<vmem>>, vector<2x2xf32>
    tpu.vector_store %arg12[%c0_35, %c0_36], %57 {strides = array<i32>} : memref<2x2xf32, #tpu.memory_space<vmem>>, vector<2x2xf32>,
    return
  }
}

</mosaic_0001>

<llo_original>
// kernel: wdcnn2_forward.6
$region0: #{wdcnn2_forward.6}
  #allocation0 [shape = 'u32[]', space=smem, size = 0x4, offset = 0x4, fixed_abs, tag = 'smem constant byte address 0x4 - core index']
  #allocation1 [shape = 'u32[144,128]{1,0:T(1,128)}', space=vmem, size = 0x12000, scoped, tag = 'internal scratch']
  %s0 = inlined_call_operand.vmem [shape: bf16[60,64], index: 0, kind: input, shape index: {}]
  %s1 = inlined_call_operand.vmem [shape: bf16[60,64], index: 1, kind: input, shape index: {}]
  %s2 = inlined_call_operand.vmem [shape: bf16[64,16], index: 2, kind: input, shape index: {}]
  %s3 = inlined_call_operand.vmem [shape: f32[1,16], index: 3, kind: input, shape index: {}]
  %s4 = inlined_call_operand.vmem [shape: bf16[60,16], index: 4, kind: output, shape index: {}]
  %s5 = sld [smem:[#allocation0]]
  $region26: #{wdcnn2_forward.6} parent=0
    _
  %s7 = ssub.s32 1, %s5
  %s8 = scalar_select 0, %s7, %s5
  // Predicated region
  $region2: #{wdcnn2_forward.6} parent=0 // pred_check
    _
  $region3: #{wdcnn2_forward.6} parent=0 // pred_check_branch
    %10 = sbr.rel (0) target = $region5
  $region4: #{wdcnn2_forward.6} parent=0 // pred_region
    _
  $region5: #{wdcnn2_forward.6} parent=0 // pred_fallthru
    _
  // Predicated region
  $region6: #{wdcnn2_forward.6} parent=0 // pred_check
    _
  $region7: #{wdcnn2_forward.6} parent=0 // pred_check_branch
    %12 = sbr.rel (0) target = $region9
  $region8: #{wdcnn2_forward.6} parent=0 // pred_region
    _
  $region9: #{wdcnn2_forward.6} parent=0 // pred_fallthru
    _
  // Predicated region
  $region10: #{wdcnn2_forward.6} parent=0 // pred_check
    _
  $region11: #{wdcnn2_forward.6} parent=0 // pred_check_branch
    %14 = sbr.rel (0) target = $region13
  $region12: #{wdcnn2_forward.6} parent=0 // pred_region
    _
  $region13: #{wdcnn2_forward.6} parent=0 // pred_fallthru
    _
  // Predicated region
  $region14: #{wdcnn2_forward.6} parent=0 // pred_check
    _
  $region15: #{wdcnn2_forward.6} parent=0 // pred_check_branch
    %16 = sbr.rel (0) target = $region17
  $region16: #{wdcnn2_forward.6} parent=0 // pred_region
    _
  $region17: #{wdcnn2_forward.6} parent=0 // pred_fallthru
    _
  %v18 = vld [vmem:[%s2] sm:$0xf]
  %v19 = vld [vmem:[%s2 + $0x4] sm:$0xf]
  %v20 = vld [vmem:[%s2 + $0x8] sm:$0xf]
  %v21 = vld [vmem:[%s2 + $0xc] sm:$0xf]
  %v22 = vld [vmem:[%s2 + $0x10] sm:$0xf]
  %v23 = vld [vmem:[%s2 + $0x14] sm:$0xf]
  %v24 = vld [vmem:[%s2 + $0x18] sm:$0xf]
  %v25 = vld [vmem:[%s2 + $0x1c] sm:$0xf]
  %v26 = vld [vmem:[%s3] sm:$0x1]
  %v27 = vld [vmem:[%s0] sm:$0xf]
  %v28 = vld [vmem:[%s0 + $0x4] sm:$0xf]
  %v29 = vld [vmem:[%s0 + $0x8] sm:$0xf]
  %v30 = vld [vmem:[%s0 + $0xc] sm:$0xf]
  %v31 = vld [vmem:[%s0 + $0x10] sm:$0xf]
  %v32 = vld [vmem:[%s0 + $0x14] sm:$0xf]
  %v33 = vld [vmem:[%s0 + $0x18] sm:$0xf]
  %v34 = vld [vmem:[%s0 + $0x1c] sm:$0x3]
  %v36 = vlaneseq
  %v37 = vshrl.u32 %v36, 7
  %v38 = vsub.s32 0, %v37
  %v39 = vrot.slane %v26, %v38
  %v49 = vunpack.c.l.b16 %v27
  %v50 = vunpack.c.l.b16 %v28
  %v51 = vunpack.c.l.b16 %v29
  %v52 = vunpack.c.l.b16 %v30
  %v53 = vunpack.c.l.b16 %v31
  %v54 = vunpack.c.l.b16 %v32
  %v55 = vunpack.c.l.b16 %v33
  %v56 = vunpack.c.l.b16 %v34
  %v57 = vpack.c.b16 %v50, %v49
  %v58 = vpack.c.b16 %v52, %v51
  %v59 = vpack.c.b16 %v54, %v53
  %v60 = vpack.c.b16 %v56, %v55
  %v69 = vunpack.c.l.b16 %v18
  %v70 = vunpack.c.l.b16 %v19
  %v71 = vunpack.c.l.b16 %v20
  %v72 = vunpack.c.l.b16 %v21
  %v73 = vunpack.c.l.b16 %v22
  %v74 = vunpack.c.l.b16 %v23
  %v75 = vunpack.c.l.b16 %v24
  %v76 = vunpack.c.l.b16 %v25
  %v77 = vpack.c.b16 %v70, %v69
  %v78 = vpack.c.b16 %v72, %v71
  %v79 = vpack.c.b16 %v74, %v73
  %v80 = vpack.c.b16 %v76, %v75
  %vm85 = vcmask 523264
  %v87 = vsel %vm85, %v57, 0
  %v90 = vsel %vm85, %v58, 0
  %v93 = vsel %vm85, %v59, 0
  %v96 = vsel %vm85, %v60, 0
  %98 = vmatprep.subr.bf16.mxu0 0
  %99 = vmatpush1.bf16.msra.mxu0 0
  %100 = vmatprep.subr.bf16.mxu0 0
  %101 = vmatpush1.bf16.msra.mxu0 0
  %102 = vmatprep.subr.bf16.mxu0 0
  %103 = vmatpush1.bf16.msra.mxu0 0
  %104 = vmatprep.subr.bf16.mxu0 0
  %105 = vmatpush1.bf16.msra.mxu0 0
  %106 = vmatprep.subr.bf16.mxu0 0
  %107 = vmatpush1.bf16.msra.mxu0 %v80
  %108 = vmatprep.subr.bf16.mxu0 0
  %109 = vmatpush1.bf16.msra.mxu0 %v79
  %110 = vmatprep.subr.bf16.mxu0 0
  %111 = vmatpush1.bf16.msra.mxu0 %v78
  %112 = vmatprep.subr.bf16.mxu0 0
  %113 = vmatpush1.bf16.msra.mxu0 %v77
  %114 = vmatprep.subr.bf16.mxu0 0
  %115 = vmatpush2.bf16.msra.mxu0 0
  %116 = vmatprep.subr.bf16.mxu0 0
  %117 = vmatpush2.bf16.msra.mxu0 0
  %118 = vmatprep.subr.bf16.mxu0 0
  %119 = vmatpush2.bf16.msra.mxu0 0
  %120 = vmatprep.subr.bf16.mxu0 0
  %121 = vmatpush2.bf16.msra.mxu0 0
  %122 = vmatprep.subr.bf16.mxu0 0
  %123 = vmatpush2.bf16.msra.mxu0 0
  %124 = vmatprep.subr.bf16.mxu0 0
  %125 = vmatpush2.bf16.msra.mxu0 0
  %126 = vmatprep.subr.bf16.mxu0 0
  %127 = vmatpush2.bf16.msra.mxu0 0
  %128 = vmatprep.subr.bf16.mxu0 0
  %129 = vmatpush2.bf16.msra.mxu0 0
  %130 = vmatprep.mubr.bf16.mxu0 0
  %131 = vmatmul.mubr.bf16.gmra.mxu0 %v87
  %v132 = vpop.f32.mrf.mxu0
  %v133 = vadd.f32 %v39, %v132
  %v134 = vpop.f32.mrf.mxu0
  %v135 = vpop.f32.mrf.mxu0
  %v136 = vadd.f32 %v39, %v135
  %v137 = vpop.f32.mrf.mxu0
  %138 = vmatprep.mubr.bf16.mxu0 0
  %139 = vmatmul.mubr.bf16.gmra.mxu0 %v90
  %v140 = vpop.f32.mrf.mxu0
  %v141 = vadd.f32 %v39, %v140
  %v142 = vpop.f32.mrf.mxu0
  %v143 = vpop.f32.mrf.mxu0
  %v144 = vadd.f32 %v39, %v143
  %v145 = vpop.f32.mrf.mxu0
  %146 = vmatprep.mubr.bf16.mxu0 0
  %147 = vmatmul.mubr.bf16.gmra.mxu0 %v93
  %v148 = vpop.f32.mrf.mxu0
  %v149 = vadd.f32 %v39, %v148
  %v150 = vpop.f32.mrf.mxu0
  %v151 = vpop.f32.mrf.mxu0
  %v152 = vadd.f32 %v39, %v151
  %v153 = vpop.f32.mrf.mxu0
  %154 = vmatprep.mubr.bf16.mxu0 0
  %155 = vmatmul.mubr.bf16.gmra.mxu0 %v96
  %v156 = vpop.f32.mrf.mxu0
  %v157 = vadd.f32 %v39, %v156
  %v158 = vpop.f32.mrf.mxu0
  %v159 = vpop.f32.mrf.mxu0
  %v160 = vadd.f32 %v39, %v159
  %v161 = vpop.f32.mrf.mxu0
  %162 = vdwg.mxu0
  %v163 = vld [vmem:[%s1] sm:$0xf]
  %v164 = vld [vmem:[%s1 + $0x4] sm:$0xf]
  %v165 = vld [vmem:[%s1 + $0x8] sm:$0xf]
  %v166 = vld [vmem:[%s1 + $0xc] sm:$0xf]
  %v167 = vld [vmem:[%s1 + $0x10] sm:$0xf]
  %v168 = vld [vmem:[%s1 + $0x14] sm:$0xf]
  %v169 = vld [vmem:[%s1 + $0x18] sm:$0xf]
  %v170 = vld [vmem:[%s1 + $0x1c] sm:$0x3]
  %v179 = vunpack.c.l.b16 %v163
  %v180 = vunpack.c.l.b16 %v164
  %v181 = vunpack.c.l.b16 %v165
  %v182 = vunpack.c.l.b16 %v166
  %v183 = vunpack.c.l.b16 %v167
  %v184 = vunpack.c.l.b16 %v168
  %v185 = vunpack.c.l.b16 %v169
  %v186 = vunpack.c.l.b16 %v170
  %v187 = vpack.c.b16 %v180, %v179
  %v188 = vpack.c.b16 %v182, %v181
  %v189 = vpack.c.b16 %v184, %v183
  %v190 = vpack.c.b16 %v186, %v185
  %v192 = vsel %vm85, %v187, 0
  %v195 = vsel %vm85, %v188, 0
  %v198 = vsel %vm85, %v189, 0
  %v201 = vsel %vm85, %v190, 0
  %203 = vmatprep.subr.bf16.mxu0 0
  %204 = vmatpush1.bf16.msra.mxu0 0
  %205 = vmatprep.subr.bf16.mxu0 0
  %206 = vmatpush1.bf16.msra.mxu0 0
  %207 = vmatprep.subr.bf16.mxu0 0
  %208 = vmatpush1.bf16.msra.mxu0 0
  %209 = vmatprep.subr.bf16.mxu0 0
  %210 = vmatpush1.bf16.msra.mxu0 0
  %211 = vmatprep.subr.bf16.mxu0 0
  %212 = vmatpush1.bf16.msra.mxu0 %v80
  %213 = vmatprep.subr.bf16.mxu0 0
  %214 = vmatpush1.bf16.msra.mxu0 %v79
  %215 = vmatprep.subr.bf16.mxu0 0
  %216 = vmatpush1.bf16.msra.mxu0 %v78
  %217 = vmatprep.subr.bf16.mxu0 0
  %218 = vmatpush1.bf16.msra.mxu0 %v77
  %219 = vmatprep.subr.bf16.mxu0 0
  %220 = vmatpush2.bf16.msra.mxu0 0
  %221 = vmatprep.subr.bf16.mxu0 0
  %222 = vmatpush2.bf16.msra.mxu0 0
  %223 = vmatprep.subr.bf16.mxu0 0
  %224 = vmatpush2.bf16.msra.mxu0 0
  %225 = vmatprep.subr.bf16.mxu0 0
  %226 = vmatpush2.bf16.msra.mxu0 0
  %227 = vmatprep.subr.bf16.mxu0 0
  %228 = vmatpush2.bf16.msra.mxu0 0
  %229 = vmatprep.subr.bf16.mxu0 0
  %230 = vmatpush2.bf16.msra.mxu0 0
  %231 = vmatprep.subr.bf16.mxu0 0
  %232 = vmatpush2.bf16.msra.mxu0 0
  %233 = vmatprep.subr.bf16.mxu0 0
  %234 = vmatpush2.bf16.msra.mxu0 0
  %235 = vmatprep.mubr.bf16.mxu0 0
  %236 = vmatmul.mubr.bf16.gmra.mxu0 %v192
  %v237 = vpop.f32.mrf.mxu0
  %v238 = vadd.f32 %v39, %v237
  %v239 = vpop.f32.mrf.mxu0
  %v240 = vpop.f32.mrf.mxu0
  %v241 = vadd.f32 %v39, %v240
  %v242 = vpop.f32.mrf.mxu0
  %243 = vmatprep.mubr.bf16.mxu0 0
  %244 = vmatmul.mubr.bf16.gmra.mxu0 %v195
  %v245 = vpop.f32.mrf.mxu0
  %v246 = vadd.f32 %v39, %v245
  %v247 = vpop.f32.mrf.mxu0
  %v248 = vpop.f32.mrf.mxu0
  %v249 = vadd.f32 %v39, %v248
  %v250 = vpop.f32.mrf.mxu0
  %251 = vmatprep.mubr.bf16.mxu0 0
  %252 = vmatmul.mubr.bf16.gmra.mxu0 %v198
  %v253 = vpop.f32.mrf.mxu0
  %v254 = vadd.f32 %v39, %v253
  %v255 = vpop.f32.mrf.mxu0
  %v256 = vpop.f32.mrf.mxu0
  %v257 = vadd.f32 %v39, %v256
  %v258 = vpop.f32.mrf.mxu0
  %259 = vmatprep.mubr.bf16.mxu0 0
  %260 = vmatmul.mubr.bf16.gmra.mxu0 %v201
  %v261 = vpop.f32.mrf.mxu0
  %v262 = vadd.f32 %v39, %v261
  %v263 = vpop.f32.mrf.mxu0
  %v264 = vpop.f32.mrf.mxu0
  %v265 = vadd.f32 %v39, %v264
  %v266 = vpop.f32.mrf.mxu0
  %267 = vdwg.mxu0
  %v268 = vmax.f32 %v133, %v238
  %v269 = vmax.f32 %v136, %v241
  %v270 = vmax.f32 %v141, %v246
  %v271 = vmax.f32 %v144, %v249
  %v272 = vmax.f32 %v149, %v254
  %v273 = vmax.f32 %v152, %v257
  %v274 = vmax.f32 %v157, %v262
  %v275 = vmax.f32 %v160, %v265
  %v276 = vmax.f32 %v268, 0.0
  %v277 = vmax.f32 %v269, 0.0
  %v278 = vmax.f32 %v270, 0.0
  %v279 = vmax.f32 %v271, 0.0
  %v280 = vmax.f32 %v272, 0.0
  %v281 = vmax.f32 %v273, 0.0
  %v282 = vmax.f32 %v274, 0.0
  %v283 = vmax.f32 %v275, 0.0
  %v284 = vpack.c.bf16 %v277, %v276
  %v285 = vpack.c.bf16 %v279, %v278
  %v286 = vpack.c.bf16 %v281, %v280
  %v287 = vpack.c.bf16 %v283, %v282
  %v292 = vunpack.c.l.b16 %v284
  %v293 = vunpack.c.h.b16 %v284
  %v294 = vunpack.c.l.b16 %v285
  %v295 = vunpack.c.h.b16 %v285
  %v296 = vunpack.c.l.b16 %v286
  %v297 = vunpack.c.h.b16 %v286
  %v298 = vunpack.c.l.b16 %v287
  %v299 = vunpack.c.h.b16 %v287
  %v300 = vpack.c.b16 %v292, %v292
  %v301 = vpack.c.b16 %v293, %v293
  %v302 = vpack.c.b16 %v294, %v294
  %v303 = vpack.c.b16 %v295, %v295
  %v304 = vpack.c.b16 %v296, %v296
  %v305 = vpack.c.b16 %v297, %v297
  %v306 = vpack.c.b16 %v298, %v298
  %v307 = vpack.c.b16 %v299, %v299
  %vm316 = vcmask 125952
  %317 = vst.msk [vmem:[%s4] sm:$0xf] %vm316, %v300
  %318 = vst.msk [vmem:[%s4 + $0x4] sm:$0xf] %vm316, %v301
  %319 = vst.msk [vmem:[%s4 + $0x8] sm:$0xf] %vm316, %v302
  %320 = vst.msk [vmem:[%s4 + $0xc] sm:$0xf] %vm316, %v303
  %321 = vst.msk [vmem:[%s4 + $0x10] sm:$0xf] %vm316, %v304
  %322 = vst.msk [vmem:[%s4 + $0x14] sm:$0xf] %vm316, %v305
  %323 = vst.msk [vmem:[%s4 + $0x18] sm:$0xf] %vm316, %v306
  %vm324 = vcmask 123904
  %325 = vst.msk [vmem:[%s4 + $0x1c] sm:$0x3] %vm324, %v307
  // Predicated region
  $region18: #{wdcnn2_forward.6} parent=0 // pred_check
    _
  $region19: #{wdcnn2_forward.6} parent=0 // pred_check_branch
    %327 = sbr.rel (0) target = $region21
  $region20: #{wdcnn2_forward.6} parent=0 // pred_region
    _
  $region21: #{wdcnn2_forward.6} parent=0 // pred_fallthru
    _
  // Predicated region
  $region22: #{wdcnn2_forward.6} parent=0 // pred_check
    _
  $region23: #{wdcnn2_forward.6} parent=0 // pred_check_branch
    %329 = sbr.rel (0) target = $region25
  $region24: #{wdcnn2_forward.6} parent=0 // pred_region
    _
  $region25: #{wdcnn2_forward.6} parent=0 // pred_fallthru
    _

// kernel: wdcnn2_forward.7
$region0: #{wdcnn2_forward.7}
  #allocation0 [shape = 'u32[]', space=smem, size = 0x4, offset = 0x4, fixed_abs, tag = 'smem constant byte address 0x4 - core index']
  #allocation1 [shape = 'u32[144,128]{1,0:T(1,128)}', space=vmem, size = 0x12000, scoped, tag = 'internal scratch']
  %s0 = inlined_call_operand.vmem [shape: bf16[30,48], index: 0, kind: input, shape index: {}]
  %s1 = inlined_call_operand.vmem [shape: bf16[30,48], index: 1, kind: input, shape index: {}]
  %s2 = inlined_call_operand.vmem [shape: bf16[48,32], index: 2, kind: input, shape index: {}]
  %s3 = inlined_call_operand.vmem [shape: f32[1,32], index: 3, kind: input, shape index: {}]
  %s4 = inlined_call_operand.vmem [shape: bf16[30,32], index: 4, kind: output, shape index: {}]
  %s5 = sld [smem:[#allocation0]]
  $region26: #{wdcnn2_forward.7} parent=0
    _
  %s7 = ssub.s32 1, %s5
  %s8 = scalar_select 0, %s7, %s5
  // Predicated region
  $region2: #{wdcnn2_forward.7} parent=0 // pred_check
    _
  $region3: #{wdcnn2_forward.7} parent=0 // pred_check_branch
    %10 = sbr.rel (0) target = $region5
  $region4: #{wdcnn2_forward.7} parent=0 // pred_region
    _
  $region5: #{wdcnn2_forward.7} parent=0 // pred_fallthru
    _
  // Predicated region
  $region6: #{wdcnn2_forward.7} parent=0 // pred_check
    _
  $region7: #{wdcnn2_forward.7} parent=0 // pred_check_branch
    %12 = sbr.rel (0) target = $region9
  $region8: #{wdcnn2_forward.7} parent=0 // pred_region
    _
  $region9: #{wdcnn2_forward.7} parent=0 // pred_fallthru
    _
  // Predicated region
  $region10: #{wdcnn2_forward.7} parent=0 // pred_check
    _
  $region11: #{wdcnn2_forward.7} parent=0 // pred_check_branch
    %14 = sbr.rel (0) target = $region13
  $region12: #{wdcnn2_forward.7} parent=0 // pred_region
    _
  $region13: #{wdcnn2_forward.7} parent=0 // pred_fallthru
    _
  // Predicated region
  $region14: #{wdcnn2_forward.7} parent=0 // pred_check
    _
  $region15: #{wdcnn2_forward.7} parent=0 // pred_check_branch
    %16 = sbr.rel (0) target = $region17
  $region16: #{wdcnn2_forward.7} parent=0 // pred_region
    _
  $region17: #{wdcnn2_forward.7} parent=0 // pred_fallthru
    _
  %v18 = vld [vmem:[%s2] sm:$0xf]
  %v19 = vld [vmem:[%s2 + $0x4] sm:$0xf]
  %v20 = vld [vmem:[%s2 + $0x8] sm:$0xf]
  %v21 = vld [vmem:[%s2 + $0xc] sm:$0xf]
  %v22 = vld [vmem:[%s2 + $0x10] sm:$0xf]
  %v23 = vld [vmem:[%s2 + $0x14] sm:$0xf]
  %v24 = vld [vmem:[%s3] sm:$0x1]
  %v25 = vld [vmem:[%s0] sm:$0xf]
  %v26 = vld [vmem:[%s0 + $0x4] sm:$0xf]
  %v27 = vld [vmem:[%s0 + $0x8] sm:$0xf]
  %v28 = vld [vmem:[%s0 + $0xc] sm:$0x7]
  %v30 = vlaneseq
  %v31 = vshrl.u32 %v30, 7
  %v32 = vsub.s32 0, %v31
  %v33 = vrot.slane %v24, %v32
  %v39 = vunpack.c.l.b16 %v25
  %v40 = vunpack.c.l.b16 %v26
  %v41 = vunpack.c.l.b16 %v27
  %v42 = vunpack.c.l.b16 %v28
  %v43 = vpack.c.b16 %v40, %v39
  %v44 = vpack.c.b16 %v42, %v41
  %v51 = vunpack.c.l.b16 %v18
  %v52 = vunpack.c.l.b16 %v19
  %v53 = vunpack.c.l.b16 %v20
  %v54 = vunpack.c.l.b16 %v21
  %v55 = vunpack.c.l.b16 %v22
  %v56 = vunpack.c.l.b16 %v23
  %v57 = vpack.c.b16 %v52, %v51
  %v58 = vpack.c.b16 %v54, %v53
  %v59 = vpack.c.b16 %v56, %v55
  %vm63 = vcmask 392192
  %v65 = vsel %vm63, %v43, 0
  %v68 = vsel %vm63, %v44, 0
  %70 = vmatprep.subr.bf16.mxu0 0
  %71 = vmatpush1.bf16.msra.mxu0 0
  %72 = vmatprep.subr.bf16.mxu0 0
  %73 = vmatpush1.bf16.msra.mxu0 0
  %74 = vmatprep.subr.bf16.mxu0 0
  %75 = vmatpush1.bf16.msra.mxu0 0
  %76 = vmatprep.subr.bf16.mxu0 0
  %77 = vmatpush1.bf16.msra.mxu0 0
  %78 = vmatprep.subr.bf16.mxu0 0
  %79 = vmatpush1.bf16.msra.mxu0 0
  %80 = vmatprep.subr.bf16.mxu0 0
  %81 = vmatpush1.bf16.msra.mxu0 %v59
  %82 = vmatprep.subr.bf16.mxu0 0
  %83 = vmatpush1.bf16.msra.mxu0 %v58
  %84 = vmatprep.subr.bf16.mxu0 0
  %85 = vmatpush1.bf16.msra.mxu0 %v57
  %86 = vmatprep.subr.bf16.mxu0 0
  %87 = vmatpush2.bf16.msra.mxu0 0
  %88 = vmatprep.subr.bf16.mxu0 0
  %89 = vmatpush2.bf16.msra.mxu0 0
  %90 = vmatprep.subr.bf16.mxu0 0
  %91 = vmatpush2.bf16.msra.mxu0 0
  %92 = vmatprep.subr.bf16.mxu0 0
  %93 = vmatpush2.bf16.msra.mxu0 0
  %94 = vmatprep.subr.bf16.mxu0 0
  %95 = vmatpush2.bf16.msra.mxu0 0
  %96 = vmatprep.subr.bf16.mxu0 0
  %97 = vmatpush2.bf16.msra.mxu0 0
  %98 = vmatprep.subr.bf16.mxu0 0
  %99 = vmatpush2.bf16.msra.mxu0 0
  %100 = vmatprep.subr.bf16.mxu0 0
  %101 = vmatpush2.bf16.msra.mxu0 0
  %102 = vmatprep.mubr.bf16.mxu0 0
  %103 = vmatmul.mubr.bf16.gmra.mxu0 %v65
  %v104 = vpop.f32.mrf.mxu0
  %v105 = vadd.f32 %v33, %v104
  %v106 = vpop.f32.mrf.mxu0
  %v107 = vpop.f32.mrf.mxu0
  %v108 = vadd.f32 %v33, %v107
  %v109 = vpop.f32.mrf.mxu0
  %110 = vmatprep.mubr.bf16.mxu0 0
  %111 = vmatmul.mubr.bf16.gmra.mxu0 %v68
  %v112 = vpop.f32.mrf.mxu0
  %v113 = vadd.f32 %v33, %v112
  %v114 = vpop.f32.mrf.mxu0
  %v115 = vpop.f32.mrf.mxu0
  %v116 = vadd.f32 %v33, %v115
  %v117 = vpop.f32.mrf.mxu0
  %118 = vdwg.mxu0
  %v119 = vld [vmem:[%s1] sm:$0xf]
  %v120 = vld [vmem:[%s1 + $0x4] sm:$0xf]
  %v121 = vld [vmem:[%s1 + $0x8] sm:$0xf]
  %v122 = vld [vmem:[%s1 + $0xc] sm:$0x7]
  %v127 = vunpack.c.l.b16 %v119
  %v128 = vunpack.c.l.b16 %v120
  %v129 = vunpack.c.l.b16 %v121
  %v130 = vunpack.c.l.b16 %v122
  %v131 = vpack.c.b16 %v128, %v127
  %v132 = vpack.c.b16 %v130, %v129
  %v134 = vsel %vm63, %v131, 0
  %v137 = vsel %vm63, %v132, 0
  %139 = vmatprep.subr.bf16.mxu0 0
  %140 = vmatpush1.bf16.msra.mxu0 0
  %141 = vmatprep.subr.bf16.mxu0 0
  %142 = vmatpush1.bf16.msra.mxu0 0
  %143 = vmatprep.subr.bf16.mxu0 0
  %144 = vmatpush1.bf16.msra.mxu0 0
  %145 = vmatprep.subr.bf16.mxu0 0
  %146 = vmatpush1.bf16.msra.mxu0 0
  %147 = vmatprep.subr.bf16.mxu0 0
  %148 = vmatpush1.bf16.msra.mxu0 0
  %149 = vmatprep.subr.bf16.mxu0 0
  %150 = vmatpush1.bf16.msra.mxu0 %v59
  %151 = vmatprep.subr.bf16.mxu0 0
  %152 = vmatpush1.bf16.msra.mxu0 %v58
  %153 = vmatprep.subr.bf16.mxu0 0
  %154 = vmatpush1.bf16.msra.mxu0 %v57
  %155 = vmatprep.subr.bf16.mxu0 0
  %156 = vmatpush2.bf16.msra.mxu0 0
  %157 = vmatprep.subr.bf16.mxu0 0
  %158 = vmatpush2.bf16.msra.mxu0 0
  %159 = vmatprep.subr.bf16.mxu0 0
  %160 = vmatpush2.bf16.msra.mxu0 0
  %161 = vmatprep.subr.bf16.mxu0 0
  %162 = vmatpush2.bf16.msra.mxu0 0
  %163 = vmatprep.subr.bf16.mxu0 0
  %164 = vmatpush2.bf16.msra.mxu0 0
  %165 = vmatprep.subr.bf16.mxu0 0
  %166 = vmatpush2.bf16.msra.mxu0 0
  %167 = vmatprep.subr.bf16.mxu0 0
  %168 = vmatpush2.bf16.msra.mxu0 0
  %169 = vmatprep.subr.bf16.mxu0 0
  %170 = vmatpush2.bf16.msra.mxu0 0
  %171 = vmatprep.mubr.bf16.mxu0 0
  %172 = vmatmul.mubr.bf16.gmra.mxu0 %v134
  %v173 = vpop.f32.mrf.mxu0
  %v174 = vadd.f32 %v33, %v173
  %v175 = vpop.f32.mrf.mxu0
  %v176 = vpop.f32.mrf.mxu0
  %v177 = vadd.f32 %v33, %v176
  %v178 = vpop.f32.mrf.mxu0
  %179 = vmatprep.mubr.bf16.mxu0 0
  %180 = vmatmul.mubr.bf16.gmra.mxu0 %v137
  %v181 = vpop.f32.mrf.mxu0
  %v182 = vadd.f32 %v33, %v181
  %v183 = vpop.f32.mrf.mxu0
  %v184 = vpop.f32.mrf.mxu0
  %v185 = vadd.f32 %v33, %v184
  %v186 = vpop.f32.mrf.mxu0
  %187 = vdwg.mxu0
  %v188 = vmax.f32 %v105, %v174
  %v189 = vmax.f32 %v108, %v177
  %v190 = vmax.f32 %v113, %v182
  %v191 = vmax.f32 %v116, %v185
  %v192 = vmax.f32 %v188, 0.0
  %v193 = vmax.f32 %v189, 0.0
  %v194 = vmax.f32 %v190, 0.0
  %v195 = vmax.f32 %v191, 0.0
  %v196 = vpack.c.bf16 %v193, %v192
  %v197 = vpack.c.bf16 %v195, %v194
  %v200 = vunpack.c.l.b16 %v196
  %v201 = vunpack.c.h.b16 %v196
  %v202 = vunpack.c.l.b16 %v197
  %v203 = vunpack.c.h.b16 %v197
  %v204 = vpack.c.b16 %v200, %v200
  %v205 = vpack.c.b16 %v201, %v201
  %v206 = vpack.c.b16 %v202, %v202
  %v207 = vpack.c.b16 %v203, %v203
  %vm212 = vcmask 257024
  %213 = vst.msk [vmem:[%s4] sm:$0xf] %vm212, %v204
  %214 = vst.msk [vmem:[%s4 + $0x4] sm:$0xf] %vm212, %v205
  %215 = vst.msk [vmem:[%s4 + $0x8] sm:$0xf] %vm212, %v206
  %vm216 = vcmask 256000
  %217 = vst.msk [vmem:[%s4 + $0xc] sm:$0x7] %vm216, %v207
  // Predicated region
  $region18: #{wdcnn2_forward.7} parent=0 // pred_check
    _
  $region19: #{wdcnn2_forward.7} parent=0 // pred_check_branch
    %219 = sbr.rel (0) target = $region21
  $region20: #{wdcnn2_forward.7} parent=0 // pred_region
    _
  $region21: #{wdcnn2_forward.7} parent=0 // pred_fallthru
    _
  // Predicated region
  $region22: #{wdcnn2_forward.7} parent=0 // pred_check
    _
  $region23: #{wdcnn2_forward.7} parent=0 // pred_check_branch
    %221 = sbr.rel (0) target = $region25
  $region24: #{wdcnn2_forward.7} parent=0 // pred_region
    _
  $region25: #{wdcnn2_forward.7} parent=0 // pred_fallthru
    _

// kernel: wdcnn2_forward.8
$region0: #{wdcnn2_forward.8}
  #allocation0 [shape = 'u32[]', space=smem, size = 0x4, offset = 0x4, fixed_abs, tag = 'smem constant byte address 0x4 - core index']
  #allocation1 [shape = 'u32[144,128]{1,0:T(1,128)}', space=vmem, size = 0x12000, scoped, tag = 'internal scratch']
  %s0 = inlined_call_operand.vmem [shape: bf16[16,64], index: 0, kind: input, shape index: {}]
  %s1 = inlined_call_operand.vmem [shape: bf16[16,64], index: 1, kind: input, shape index: {}]
  %s2 = inlined_call_operand.vmem [shape: bf16[64,64], index: 2, kind: input, shape index: {}]
  %s3 = inlined_call_operand.vmem [shape: f32[1,64], index: 3, kind: input, shape index: {}]
  %s4 = inlined_call_operand.vmem [shape: bf16[16,64], index: 4, kind: output, shape index: {}]
  %s5 = sld [smem:[#allocation0]]
  $region26: #{wdcnn2_forward.8} parent=0
    _
  %s7 = ssub.s32 1, %s5
  %s8 = scalar_select 0, %s7, %s5
  // Predicated region
  $region2: #{wdcnn2_forward.8} parent=0 // pred_check
    _
  $region3: #{wdcnn2_forward.8} parent=0 // pred_check_branch
    %10 = sbr.rel (0) target = $region5
  $region4: #{wdcnn2_forward.8} parent=0 // pred_region
    _
  $region5: #{wdcnn2_forward.8} parent=0 // pred_fallthru
    _
  // Predicated region
  $region6: #{wdcnn2_forward.8} parent=0 // pred_check
    _
  $region7: #{wdcnn2_forward.8} parent=0 // pred_check_branch
    %12 = sbr.rel (0) target = $region9
  $region8: #{wdcnn2_forward.8} parent=0 // pred_region
    _
  $region9: #{wdcnn2_forward.8} parent=0 // pred_fallthru
    _
  // Predicated region
  $region10: #{wdcnn2_forward.8} parent=0 // pred_check
    _
  $region11: #{wdcnn2_forward.8} parent=0 // pred_check_branch
    %14 = sbr.rel (0) target = $region13
  $region12: #{wdcnn2_forward.8} parent=0 // pred_region
    _
  $region13: #{wdcnn2_forward.8} parent=0 // pred_fallthru
    _
  // Predicated region
  $region14: #{wdcnn2_forward.8} parent=0 // pred_check
    _
  $region15: #{wdcnn2_forward.8} parent=0 // pred_check_branch
    %16 = sbr.rel (0) target = $region17
  $region16: #{wdcnn2_forward.8} parent=0 // pred_region
    _
  $region17: #{wdcnn2_forward.8} parent=0 // pred_fallthru
    _
  %v18 = vld [vmem:[%s2] sm:$0xf]
  %v19 = vld [vmem:[%s2 + $0x4] sm:$0xf]
  %v20 = vld [vmem:[%s2 + $0x8] sm:$0xf]
  %v21 = vld [vmem:[%s2 + $0xc] sm:$0xf]
  %v22 = vld [vmem:[%s2 + $0x10] sm:$0xf]
  %v23 = vld [vmem:[%s2 + $0x14] sm:$0xf]
  %v24 = vld [vmem:[%s2 + $0x18] sm:$0xf]
  %v25 = vld [vmem:[%s2 + $0x1c] sm:$0xf]
  %v26 = vld [vmem:[%s3] sm:$0x1]
  %v27 = vld [vmem:[%s0] sm:$0xf]
  %v28 = vld [vmem:[%s0 + $0x4] sm:$0xf]
  %v30 = vlaneseq
  %v31 = vshrl.u32 %v30, 7
  %v32 = vsub.s32 0, %v31
  %v33 = vrot.slane %v26, %v32
  %v37 = vunpack.c.l.b16 %v27
  %v38 = vunpack.c.l.b16 %v28
  %v39 = vpack.c.b16 %v38, %v37
  %v48 = vunpack.c.l.b16 %v18
  %v49 = vunpack.c.l.b16 %v19
  %v50 = vunpack.c.l.b16 %v20
  %v51 = vunpack.c.l.b16 %v21
  %v52 = vunpack.c.l.b16 %v22
  %v53 = vunpack.c.l.b16 %v23
  %v54 = vunpack.c.l.b16 %v24
  %v55 = vunpack.c.l.b16 %v25
  %v56 = vpack.c.b16 %v49, %v48
  %v57 = vpack.c.b16 %v51, %v50
  %v58 = vpack.c.b16 %v53, %v52
  %v59 = vpack.c.b16 %v55, %v54
  %vm64 = vcmask 523264
  %v66 = vsel %vm64, %v39, 0
  %68 = vmatprep.subr.bf16.mxu0 0
  %69 = vmatpush1.bf16.msra.mxu0 0
  %70 = vmatprep.subr.bf16.mxu0 0
  %71 = vmatpush1.bf16.msra.mxu0 0
  %72 = vmatprep.subr.bf16.mxu0 0
  %73 = vmatpush1.bf16.msra.mxu0 0
  %74 = vmatprep.subr.bf16.mxu0 0
  %75 = vmatpush1.bf16.msra.mxu0 0
  %76 = vmatprep.subr.bf16.mxu0 0
  %77 = vmatpush1.bf16.msra.mxu0 %v59
  %78 = vmatprep.subr.bf16.mxu0 0
  %79 = vmatpush1.bf16.msra.mxu0 %v58
  %80 = vmatprep.subr.bf16.mxu0 0
  %81 = vmatpush1.bf16.msra.mxu0 %v57
  %82 = vmatprep.subr.bf16.mxu0 0
  %83 = vmatpush1.bf16.msra.mxu0 %v56
  %84 = vmatprep.subr.bf16.mxu0 0
  %85 = vmatpush2.bf16.msra.mxu0 0
  %86 = vmatprep.subr.bf16.mxu0 0
  %87 = vmatpush2.bf16.msra.mxu0 0
  %88 = vmatprep.subr.bf16.mxu0 0
  %89 = vmatpush2.bf16.msra.mxu0 0
  %90 = vmatprep.subr.bf16.mxu0 0
  %91 = vmatpush2.bf16.msra.mxu0 0
  %92 = vmatprep.subr.bf16.mxu0 0
  %93 = vmatpush2.bf16.msra.mxu0 0
  %94 = vmatprep.subr.bf16.mxu0 0
  %95 = vmatpush2.bf16.msra.mxu0 0
  %96 = vmatprep.subr.bf16.mxu0 0
  %97 = vmatpush2.bf16.msra.mxu0 0
  %98 = vmatprep.subr.bf16.mxu0 0
  %99 = vmatpush2.bf16.msra.mxu0 0
  %100 = vmatprep.mubr.bf16.mxu0 0
  %101 = vmatmul.mubr.bf16.gmra.mxu0 %v66
  %v102 = vpop.f32.mrf.mxu0
  %v103 = vadd.f32 %v33, %v102
  %v104 = vpop.f32.mrf.mxu0
  %v105 = vpop.f32.mrf.mxu0
  %v106 = vadd.f32 %v33, %v105
  %v107 = vpop.f32.mrf.mxu0
  %108 = vdwg.mxu0
  %v109 = vld [vmem:[%s1] sm:$0xf]
  %v110 = vld [vmem:[%s1 + $0x4] sm:$0xf]
  %v113 = vunpack.c.l.b16 %v109
  %v114 = vunpack.c.l.b16 %v110
  %v115 = vpack.c.b16 %v114, %v113
  %v117 = vsel %vm64, %v115, 0
  %119 = vmatprep.subr.bf16.mxu0 0
  %120 = vmatpush1.bf16.msra.mxu0 0
  %121 = vmatprep.subr.bf16.mxu0 0
  %122 = vmatpush1.bf16.msra.mxu0 0
  %123 = vmatprep.subr.bf16.mxu0 0
  %124 = vmatpush1.bf16.msra.mxu0 0
  %125 = vmatprep.subr.bf16.mxu0 0
  %126 = vmatpush1.bf16.msra.mxu0 0
  %127 = vmatprep.subr.bf16.mxu0 0
  %128 = vmatpush1.bf16.msra.mxu0 %v59
  %129 = vmatprep.subr.bf16.mxu0 0
  %130 = vmatpush1.bf16.msra.mxu0 %v58
  %131 = vmatprep.subr.bf16.mxu0 0
  %132 = vmatpush1.bf16.msra.mxu0 %v57
  %133 = vmatprep.subr.bf16.mxu0 0
  %134 = vmatpush1.bf16.msra.mxu0 %v56
  %135 = vmatprep.subr.bf16.mxu0 0
  %136 = vmatpush2.bf16.msra.mxu0 0
  %137 = vmatprep.subr.bf16.mxu0 0
  %138 = vmatpush2.bf16.msra.mxu0 0
  %139 = vmatprep.subr.bf16.mxu0 0
  %140 = vmatpush2.bf16.msra.mxu0 0
  %141 = vmatprep.subr.bf16.mxu0 0
  %142 = vmatpush2.bf16.msra.mxu0 0
  %143 = vmatprep.subr.bf16.mxu0 0
  %144 = vmatpush2.bf16.msra.mxu0 0
  %145 = vmatprep.subr.bf16.mxu0 0
  %146 = vmatpush2.bf16.msra.mxu0 0
  %147 = vmatprep.subr.bf16.mxu0 0
  %148 = vmatpush2.bf16.msra.mxu0 0
  %149 = vmatprep.subr.bf16.mxu0 0
  %150 = vmatpush2.bf16.msra.mxu0 0
  %151 = vmatprep.mubr.bf16.mxu0 0
  %152 = vmatmul.mubr.bf16.gmra.mxu0 %v117
  %v153 = vpop.f32.mrf.mxu0
  %v154 = vadd.f32 %v33, %v153
  %v155 = vpop.f32.mrf.mxu0
  %v156 = vpop.f32.mrf.mxu0
  %v157 = vadd.f32 %v33, %v156
  %v158 = vpop.f32.mrf.mxu0
  %159 = vdwg.mxu0
  %v160 = vmax.f32 %v103, %v154
  %v161 = vmax.f32 %v106, %v157
  %v162 = vmax.f32 %v160, 0.0
  %v163 = vmax.f32 %v161, 0.0
  %v164 = vpack.c.bf16 %v163, %v162
  %v166 = vunpack.c.l.b16 %v164
  %v167 = vunpack.c.h.b16 %v164
  %v168 = vpack.c.b16 %v166, %v166
  %v169 = vpack.c.b16 %v167, %v167
  %vm172 = vcmask 519168
  %173 = vst.msk [vmem:[%s4] sm:$0xf] %vm172, %v168
  %174 = vst.msk [vmem:[%s4 + $0x4] sm:$0xf] %vm172, %v169
  // Predicated region
  $region18: #{wdcnn2_forward.8} parent=0 // pred_check
    _
  $region19: #{wdcnn2_forward.8} parent=0 // pred_check_branch
    %176 = sbr.rel (0) target = $region21
  $region20: #{wdcnn2_forward.8} parent=0 // pred_region
    _
  $region21: #{wdcnn2_forward.8} parent=0 // pred_fallthru
    _
  // Predicated region
  $region22: #{wdcnn2_forward.8} parent=0 // pred_check
    _
  $region23: #{wdcnn2_forward.8} parent=0 // pred_check_branch
    %178 = sbr.rel (0) target = $region25
  $region24: #{wdcnn2_forward.8} parent=0 // pred_region
    _
  $region25: #{wdcnn2_forward.8} parent=0 // pred_fallthru
    _

// kernel: wdcnn2_forward.9
$region0: #{wdcnn2_forward.9}
  #allocation0 [shape = 'u32[]', space=smem, size = 0x4, offset = 0x4, fixed_abs, tag = 'smem constant byte address 0x4 - core index']
  #allocation1 [shape = 'u32[144,128]{1,0:T(1,128)}', space=vmem, size = 0x12000, scoped, tag = 'internal scratch']
  %s0 = inlined_call_operand.vmem [shape: bf16[8,192], index: 0, kind: input, shape index: {}]
  %s1 = inlined_call_operand.vmem [shape: bf16[8,192], index: 1, kind: input, shape index: {}]
  %s2 = inlined_call_operand.vmem [shape: bf16[192,64], index: 2, kind: input, shape index: {}]
  %s3 = inlined_call_operand.vmem [shape: f32[1,64], index: 3, kind: input, shape index: {}]
  %s4 = inlined_call_operand.vmem [shape: bf16[8,64], index: 4, kind: output, shape index: {}]
  %s5 = sld [smem:[#allocation0]]
  $region26: #{wdcnn2_forward.9} parent=0
    _
  %s7 = ssub.s32 1, %s5
  %s8 = scalar_select 0, %s7, %s5
  // Predicated region
  $region2: #{wdcnn2_forward.9} parent=0 // pred_check
    _
  $region3: #{wdcnn2_forward.9} parent=0 // pred_check_branch
    %10 = sbr.rel (0) target = $region5
  $region4: #{wdcnn2_forward.9} parent=0 // pred_region
    _
  $region5: #{wdcnn2_forward.9} parent=0 // pred_fallthru
    _
  // Predicated region
  $region6: #{wdcnn2_forward.9} parent=0 // pred_check
    _
  $region7: #{wdcnn2_forward.9} parent=0 // pred_check_branch
    %12 = sbr.rel (0) target = $region9
  $region8: #{wdcnn2_forward.9} parent=0 // pred_region
    _
  $region9: #{wdcnn2_forward.9} parent=0 // pred_fallthru
    _
  // Predicated region
  $region10: #{wdcnn2_forward.9} parent=0 // pred_check
    _
  $region11: #{wdcnn2_forward.9} parent=0 // pred_check_branch
    %14 = sbr.rel (0) target = $region13
  $region12: #{wdcnn2_forward.9} parent=0 // pred_region
    _
  $region13: #{wdcnn2_forward.9} parent=0 // pred_fallthru
    _
  // Predicated region
  $region14: #{wdcnn2_forward.9} parent=0 // pred_check
    _
  $region15: #{wdcnn2_forward.9} parent=0 // pred_check_branch
    %16 = sbr.rel (0) target = $region17
  $region16: #{wdcnn2_forward.9} parent=0 // pred_region
    _
  $region17: #{wdcnn2_forward.9} parent=0 // pred_fallthru
    _
  %v18 = vld [vmem:[%s2] sm:$0xf]
  %v19 = vld [vmem:[%s2 + $0x4] sm:$0xf]
  %v20 = vld [vmem:[%s2 + $0x8] sm:$0xf]
  %v21 = vld [vmem:[%s2 + $0xc] sm:$0xf]
  %v22 = vld [vmem:[%s2 + $0x10] sm:$0xf]
  %v23 = vld [vmem:[%s2 + $0x14] sm:$0xf]
  %v24 = vld [vmem:[%s2 + $0x18] sm:$0xf]
  %v25 = vld [vmem:[%s2 + $0x1c] sm:$0xf]
  %v26 = vld [vmem:[%s2 + $0x20] sm:$0xf]
  %v27 = vld [vmem:[%s2 + $0x24] sm:$0xf]
  %v28 = vld [vmem:[%s2 + $0x28] sm:$0xf]
  %v29 = vld [vmem:[%s2 + $0x2c] sm:$0xf]
  %v30 = vld [vmem:[%s2 + $0x30] sm:$0xf]
  %v31 = vld [vmem:[%s2 + $0x34] sm:$0xf]
  %v32 = vld [vmem:[%s2 + $0x38] sm:$0xf]
  %v33 = vld [vmem:[%s2 + $0x3c] sm:$0xf]
  %v34 = vld [vmem:[%s2 + $0x40] sm:$0xf]
  %v35 = vld [vmem:[%s2 + $0x44] sm:$0xf]
  %v36 = vld [vmem:[%s2 + $0x48] sm:$0xf]
  %v37 = vld [vmem:[%s2 + $0x4c] sm:$0xf]
  %v38 = vld [vmem:[%s2 + $0x50] sm:$0xf]
  %v39 = vld [vmem:[%s2 + $0x54] sm:$0xf]
  %v40 = vld [vmem:[%s2 + $0x58] sm:$0xf]
  %v41 = vld [vmem:[%s2 + $0x5c] sm:$0xf]
  %v42 = vld [vmem:[%s3] sm:$0x1]
  %v43 = vld [vmem:[%s0] sm:$0xff]
  %v45 = vlaneseq
  %v46 = vshrl.u32 %v45, 7
  %v47 = vsub.s32 0, %v46
  %v48 = vrot.slane %v42, %v47
  %v51 = vunpack.c.l.b16 %v43
  %v52 = vunpack.c.h.b16 %v43
  %v53 = vpack.c.b16 %v51, %v51
  %v54 = vpack.c.b16 %v52, %v52
  %v80 = vunpack.c.l.b16 %v18
  %v81 = vunpack.c.l.b16 %v19
  %v82 = vunpack.c.l.b16 %v20
  %v83 = vunpack.c.l.b16 %v21
  %v84 = vunpack.c.l.b16 %v22
  %v85 = vunpack.c.l.b16 %v23
  %v86 = vunpack.c.l.b16 %v24
  %v87 = vunpack.c.l.b16 %v25
  %v88 = vunpack.c.l.b16 %v26
  %v89 = vunpack.c.l.b16 %v27
  %v90 = vunpack.c.l.b16 %v28
  %v91 = vunpack.c.l.b16 %v29
  %v92 = vunpack.c.l.b16 %v30
  %v93 = vunpack.c.l.b16 %v31
  %v94 = vunpack.c.l.b16 %v32
  %v95 = vunpack.c.l.b16 %v33
  %v96 = vunpack.c.l.b16 %v34
  %v97 = vunpack.c.l.b16 %v35
  %v98 = vunpack.c.l.b16 %v36
  %v99 = vunpack.c.l.b16 %v37
  %v100 = vunpack.c.l.b16 %v38
  %v101 = vunpack.c.l.b16 %v39
  %v102 = vunpack.c.l.b16 %v40
  %v103 = vunpack.c.l.b16 %v41
  %v104 = vpack.c.b16 %v81, %v80
  %v105 = vpack.c.b16 %v83, %v82
  %v106 = vpack.c.b16 %v85, %v84
  %v107 = vpack.c.b16 %v87, %v86
  %v108 = vpack.c.b16 %v89, %v88
  %v109 = vpack.c.b16 %v91, %v90
  %v110 = vpack.c.b16 %v93, %v92
  %v111 = vpack.c.b16 %v95, %v94
  %v112 = vpack.c.b16 %v97, %v96
  %v113 = vpack.c.b16 %v99, %v98
  %v114 = vpack.c.b16 %v101, %v100
  %v115 = vpack.c.b16 %v103, %v102
  %vm128 = vcmask 523264
  %v130 = vsel %vm128, %v54, 0
  %132 = vmatprep.subr.bf16.mxu0 0
  %133 = vmatpush1.bf16.msra.mxu0 %v111
  %134 = vmatprep.subr.bf16.mxu0 0
  %135 = vmatpush1.bf16.msra.mxu0 %v110
  %136 = vmatprep.subr.bf16.mxu0 0
  %137 = vmatpush1.bf16.msra.mxu0 %v109
  %138 = vmatprep.subr.bf16.mxu0 0
  %139 = vmatpush1.bf16.msra.mxu0 %v108
  %140 = vmatprep.subr.bf16.mxu0 0
  %141 = vmatpush1.bf16.msra.mxu0 %v107
  %142 = vmatprep.subr.bf16.mxu0 0
  %143 = vmatpush1.bf16.msra.mxu0 %v106
  %144 = vmatprep.subr.bf16.mxu0 0
  %145 = vmatpush1.bf16.msra.mxu0 %v105
  %146 = vmatprep.subr.bf16.mxu0 0
  %147 = vmatpush1.bf16.msra.mxu0 %v104
  %148 = vmatprep.subr.bf16.mxu0 0
  %149 = vmatpush2.bf16.msra.mxu0 0
  %150 = vmatprep.subr.bf16.mxu0 0
  %151 = vmatpush2.bf16.msra.mxu0 0
  %152 = vmatprep.subr.bf16.mxu0 0
  %153 = vmatpush2.bf16.msra.mxu0 0
  %154 = vmatprep.subr.bf16.mxu0 0
  %155 = vmatpush2.bf16.msra.mxu0 0
  %156 = vmatprep.subr.bf16.mxu0 0
  %157 = vmatpush2.bf16.msra.mxu0 %v115
  %158 = vmatprep.subr.bf16.mxu0 0
  %159 = vmatpush2.bf16.msra.mxu0 %v114
  %160 = vmatprep.subr.bf16.mxu0 0
  %161 = vmatpush2.bf16.msra.mxu0 %v113
  %162 = vmatprep.subr.bf16.mxu0 0
  %163 = vmatpush2.bf16.msra.mxu0 %v112
  %164 = vmatprep.mubr.bf16.mxu0 %v130
  %165 = vmatmul.mubr.bf16.gmra.mxu0 %v53
  %v166 = vpop.f32.mrf.mxu0
  %v167 = vadd.f32 %v48, %v166
  %v168 = vpop.f32.mrf.mxu0
  %v169 = vpop.f32.mrf.mxu0
  %v170 = vpop.f32.mrf.mxu0
  %171 = vdwg.mxu0
  %v172 = vld [vmem:[%s1] sm:$0xff]
  %v174 = vunpack.c.l.b16 %v172
  %v175 = vunpack.c.h.b16 %v172
  %v176 = vpack.c.b16 %v174, %v174
  %v177 = vpack.c.b16 %v175, %v175
  %v180 = vsel %vm128, %v177, 0
  %182 = vmatprep.subr.bf16.mxu0 0
  %183 = vmatpush1.bf16.msra.mxu0 %v111
  %184 = vmatprep.subr.bf16.mxu0 0
  %185 = vmatpush1.bf16.msra.mxu0 %v110
  %186 = vmatprep.subr.bf16.mxu0 0
  %187 = vmatpush1.bf16.msra.mxu0 %v109
  %188 = vmatprep.subr.bf16.mxu0 0
  %189 = vmatpush1.bf16.msra.mxu0 %v108
  %190 = vmatprep.subr.bf16.mxu0 0
  %191 = vmatpush1.bf16.msra.mxu0 %v107
  %192 = vmatprep.subr.bf16.mxu0 0
  %193 = vmatpush1.bf16.msra.mxu0 %v106
  %194 = vmatprep.subr.bf16.mxu0 0
  %195 = vmatpush1.bf16.msra.mxu0 %v105
  %196 = vmatprep.subr.bf16.mxu0 0
  %197 = vmatpush1.bf16.msra.mxu0 %v104
  %198 = vmatprep.subr.bf16.mxu0 0
  %199 = vmatpush2.bf16.msra.mxu0 0
  %200 = vmatprep.subr.bf16.mxu0 0
  %201 = vmatpush2.bf16.msra.mxu0 0
  %202 = vmatprep.subr.bf16.mxu0 0
  %203 = vmatpush2.bf16.msra.mxu0 0
  %204 = vmatprep.subr.bf16.mxu0 0
  %205 = vmatpush2.bf16.msra.mxu0 0
  %206 = vmatprep.subr.bf16.mxu0 0
  %207 = vmatpush2.bf16.msra.mxu0 %v115
  %208 = vmatprep.subr.bf16.mxu0 0
  %209 = vmatpush2.bf16.msra.mxu0 %v114
  %210 = vmatprep.subr.bf16.mxu0 0
  %211 = vmatpush2.bf16.msra.mxu0 %v113
  %212 = vmatprep.subr.bf16.mxu0 0
  %213 = vmatpush2.bf16.msra.mxu0 %v112
  %214 = vmatprep.mubr.bf16.mxu0 %v180
  %215 = vmatmul.mubr.bf16.gmra.mxu0 %v176
  %v216 = vpop.f32.mrf.mxu0
  %v217 = vadd.f32 %v48, %v216
  %v218 = vpop.f32.mrf.mxu0
  %v219 = vpop.f32.mrf.mxu0
  %v220 = vpop.f32.mrf.mxu0
  %221 = vdwg.mxu0
  %v222 = vmax.f32 %v167, %v217
  %v223 = vmax.f32 %v222, 0.0
  %v224 = vpack.c.bf16 %v223, %v223
  %vm225 = vcmask 519168
  %226 = vst.msk [vmem:[%s4] sm:$0xf] %vm225, %v224
  // Predicated region
  $region18: #{wdcnn2_forward.9} parent=0 // pred_check
    _
  $region19: #{wdcnn2_forward.9} parent=0 // pred_check_branch
    %228 = sbr.rel (0) target = $region21
  $region20: #{wdcnn2_forward.9} parent=0 // pred_region
    _
  $region21: #{wdcnn2_forward.9} parent=0 // pred_fallthru
    _
  // Predicated region
  $region22: #{wdcnn2_forward.9} parent=0 // pred_check
    _
  $region23: #{wdcnn2_forward.9} parent=0 // pred_check_branch
    %230 = sbr.rel (0) target = $region25
  $region24: #{wdcnn2_forward.9} parent=0 // pred_region
    _
  $region25: #{wdcnn2_forward.9} parent=0 // pred_fallthru
    _

// kernel: wdcnn2_forward.10
$region0: #{wdcnn2_forward.10}
  #allocation0 [shape = 'u32[]', space=smem, size = 0x4, offset = 0x4, fixed_abs, tag = 'smem constant byte address 0x4 - core index']
  #allocation1 [shape = 'u32[144,128]{1,0:T(1,128)}', space=vmem, size = 0x12000, scoped, tag = 'internal scratch']
  %s0 = inlined_call_operand.vmem [shape: bf16[2,192], index: 0, kind: input, shape index: {}]
  %s1 = inlined_call_operand.vmem [shape: bf16[2,192], index: 1, kind: input, shape index: {}]
  %s2 = inlined_call_operand.vmem [shape: bf16[192,64], index: 2, kind: input, shape index: {}]
  %s3 = inlined_call_operand.vmem [shape: f32[1,64], index: 3, kind: input, shape index: {}]
  %s4 = inlined_call_operand.vmem [shape: bf16[2,64], index: 4, kind: output, shape index: {}]
  %s5 = sld [smem:[#allocation0]]
  $region26: #{wdcnn2_forward.10} parent=0
    _
  %s7 = ssub.s32 1, %s5
  %s8 = scalar_select 0, %s7, %s5
  // Predicated region
  $region2: #{wdcnn2_forward.10} parent=0 // pred_check
    _
  $region3: #{wdcnn2_forward.10} parent=0 // pred_check_branch
    %10 = sbr.rel (0) target = $region5
  $region4: #{wdcnn2_forward.10} parent=0 // pred_region
    _
  $region5: #{wdcnn2_forward.10} parent=0 // pred_fallthru
    _
  // Predicated region
  $region6: #{wdcnn2_forward.10} parent=0 // pred_check
    _
  $region7: #{wdcnn2_forward.10} parent=0 // pred_check_branch
    %12 = sbr.rel (0) target = $region9
  $region8: #{wdcnn2_forward.10} parent=0 // pred_region
    _
  $region9: #{wdcnn2_forward.10} parent=0 // pred_fallthru
    _
  // Predicated region
  $region10: #{wdcnn2_forward.10} parent=0 // pred_check
    _
  $region11: #{wdcnn2_forward.10} parent=0 // pred_check_branch
    %14 = sbr.rel (0) target = $region13
  $region12: #{wdcnn2_forward.10} parent=0 // pred_region
    _
  $region13: #{wdcnn2_forward.10} parent=0 // pred_fallthru
    _
  // Predicated region
  $region14: #{wdcnn2_forward.10} parent=0 // pred_check
    _
  $region15: #{wdcnn2_forward.10} parent=0 // pred_check_branch
    %16 = sbr.rel (0) target = $region17
  $region16: #{wdcnn2_forward.10} parent=0 // pred_region
    _
  $region17: #{wdcnn2_forward.10} parent=0 // pred_fallthru
    _
  %v18 = vld [vmem:[%s2] sm:$0xf]
  %v19 = vld [vmem:[%s2 + $0x4] sm:$0xf]
  %v20 = vld [vmem:[%s2 + $0x8] sm:$0xf]
  %v21 = vld [vmem:[%s2 + $0xc] sm:$0xf]
  %v22 = vld [vmem:[%s2 + $0x10] sm:$0xf]
  %v23 = vld [vmem:[%s2 + $0x14] sm:$0xf]
  %v24 = vld [vmem:[%s2 + $0x18] sm:$0xf]
  %v25 = vld [vmem:[%s2 + $0x1c] sm:$0xf]
  %v26 = vld [vmem:[%s2 + $0x20] sm:$0xf]
  %v27 = vld [vmem:[%s2 + $0x24] sm:$0xf]
  %v28 = vld [vmem:[%s2 + $0x28] sm:$0xf]
  %v29 = vld [vmem:[%s2 + $0x2c] sm:$0xf]
  %v30 = vld [vmem:[%s2 + $0x30] sm:$0xf]
  %v31 = vld [vmem:[%s2 + $0x34] sm:$0xf]
  %v32 = vld [vmem:[%s2 + $0x38] sm:$0xf]
  %v33 = vld [vmem:[%s2 + $0x3c] sm:$0xf]
  %v34 = vld [vmem:[%s2 + $0x40] sm:$0xf]
  %v35 = vld [vmem:[%s2 + $0x44] sm:$0xf]
  %v36 = vld [vmem:[%s2 + $0x48] sm:$0xf]
  %v37 = vld [vmem:[%s2 + $0x4c] sm:$0xf]
  %v38 = vld [vmem:[%s2 + $0x50] sm:$0xf]
  %v39 = vld [vmem:[%s2 + $0x54] sm:$0xf]
  %v40 = vld [vmem:[%s2 + $0x58] sm:$0xf]
  %v41 = vld [vmem:[%s2 + $0x5c] sm:$0xf]
  %v42 = vld [vmem:[%s3] sm:$0x1]
  %v43 = vld [vmem:[%s0] sm:$0x3]
  %v45 = vlaneseq
  %v46 = vshrl.u32 %v45, 7
  %v47 = vsub.s32 0, %v46
  %v48 = vrot.slane %v42, %v47
  %v52 = vunpack.c.l.s4 1966171168
  %v53 = vunpack.c.0.s8 %v52
  %v54 = vlaneseq
  %v55 = vshrl.u32 %v54, 7
  %v56 = vsub.s32 %v53, %v55
  %v57 = vrot.slane %v43, %v56
  %v58 = vcombine.high %v57, %v57
  %v60 = vunpack.c.l.s4 1966171168
  %v61 = vunpack.c.0.s8 %v60
  %v62 = vlaneseq
  %v63 = vshrl.u32 %v62, 7
  %v64 = vsub.s32 %v61, %v63
  %v65 = vrot.slane %v57, %v64
  %v67 = vunpack.c.l.s4 1966171168
  %v68 = vunpack.c.0.s8 %v67
  %v69 = vlaneseq
  %v70 = vshrl.u32 %v69, 7
  %v71 = vsub.s32 %v68, %v70
  %v72 = vrot.slane %v58, %v71
  %v98 = vunpack.c.l.b16 %v18
  %v99 = vunpack.c.l.b16 %v19
  %v100 = vunpack.c.l.b16 %v20
  %v101 = vunpack.c.l.b16 %v21
  %v102 = vunpack.c.l.b16 %v22
  %v103 = vunpack.c.l.b16 %v23
  %v104 = vunpack.c.l.b16 %v24
  %v105 = vunpack.c.l.b16 %v25
  %v106 = vunpack.c.l.b16 %v26
  %v107 = vunpack.c.l.b16 %v27
  %v108 = vunpack.c.l.b16 %v28
  %v109 = vunpack.c.l.b16 %v29
  %v110 = vunpack.c.l.b16 %v30
  %v111 = vunpack.c.l.b16 %v31
  %v112 = vunpack.c.l.b16 %v32
  %v113 = vunpack.c.l.b16 %v33
  %v114 = vunpack.c.l.b16 %v34
  %v115 = vunpack.c.l.b16 %v35
  %v116 = vunpack.c.l.b16 %v36
  %v117 = vunpack.c.l.b16 %v37
  %v118 = vunpack.c.l.b16 %v38
  %v119 = vunpack.c.l.b16 %v39
  %v120 = vunpack.c.l.b16 %v40
  %v121 = vunpack.c.l.b16 %v41
  %v122 = vpack.c.b16 %v99, %v98
  %v123 = vpack.c.b16 %v101, %v100
  %v124 = vpack.c.b16 %v103, %v102
  %v125 = vpack.c.b16 %v105, %v104
  %v126 = vpack.c.b16 %v107, %v106
  %v127 = vpack.c.b16 %v109, %v108
  %v128 = vpack.c.b16 %v111, %v110
  %v129 = vpack.c.b16 %v113, %v112
  %v130 = vpack.c.b16 %v115, %v114
  %v131 = vpack.c.b16 %v117, %v116
  %v132 = vpack.c.b16 %v119, %v118
  %v133 = vpack.c.b16 %v121, %v120
  %vm146 = vcmask 523264
  %v148 = vsel %vm146, %v72, 0
  %150 = vmatprep.subr.bf16.mxu0 0
  %151 = vmatpush1.bf16.msra.mxu0 %v129
  %152 = vmatprep.subr.bf16.mxu0 0
  %153 = vmatpush1.bf16.msra.mxu0 %v128
  %154 = vmatprep.subr.bf16.mxu0 0
  %155 = vmatpush1.bf16.msra.mxu0 %v127
  %156 = vmatprep.subr.bf16.mxu0 0
  %157 = vmatpush1.bf16.msra.mxu0 %v126
  %158 = vmatprep.subr.bf16.mxu0 0
  %159 = vmatpush1.bf16.msra.mxu0 %v125
  %160 = vmatprep.subr.bf16.mxu0 0
  %161 = vmatpush1.bf16.msra.mxu0 %v124
  %162 = vmatprep.subr.bf16.mxu0 0
  %163 = vmatpush1.bf16.msra.mxu0 %v123
  %164 = vmatprep.subr.bf16.mxu0 0
  %165 = vmatpush1.bf16.msra.mxu0 %v122
  %166 = vmatprep.subr.bf16.mxu0 0
  %167 = vmatpush2.bf16.msra.mxu0 0
  %168 = vmatprep.subr.bf16.mxu0 0
  %169 = vmatpush2.bf16.msra.mxu0 0
  %170 = vmatprep.subr.bf16.mxu0 0
  %171 = vmatpush2.bf16.msra.mxu0 0
  %172 = vmatprep.subr.bf16.mxu0 0
  %173 = vmatpush2.bf16.msra.mxu0 0
  %174 = vmatprep.subr.bf16.mxu0 0
  %175 = vmatpush2.bf16.msra.mxu0 %v133
  %176 = vmatprep.subr.bf16.mxu0 0
  %177 = vmatpush2.bf16.msra.mxu0 %v132
  %178 = vmatprep.subr.bf16.mxu0 0
  %179 = vmatpush2.bf16.msra.mxu0 %v131
  %180 = vmatprep.subr.bf16.mxu0 0
  %181 = vmatpush2.bf16.msra.mxu0 %v130
  %182 = vmatprep.mubr.bf16.mxu0 %v148
  %183 = vmatmul.mubr.bf16.gmra.mxu0 %v65
  %v184 = vpop.f32.mrf.mxu0
  %v185 = vadd.f32 %v48, %v184
  %v186 = vpop.f32.mrf.mxu0
  %v187 = vpop.f32.mrf.mxu0
  %v188 = vpop.f32.mrf.mxu0
  %189 = vdwg.mxu0
  %v190 = vld [vmem:[%s1] sm:$0x3]
  %v193 = vunpack.c.l.s4 1966171168
  %v194 = vunpack.c.0.s8 %v193
  %v195 = vlaneseq
  %v196 = vshrl.u32 %v195, 7
  %v197 = vsub.s32 %v194, %v196
  %v198 = vrot.slane %v190, %v197
  %v199 = vcombine.high %v198, %v198
  %v201 = vunpack.c.l.s4 1966171168
  %v202 = vunpack.c.0.s8 %v201
  %v203 = vlaneseq
  %v204 = vshrl.u32 %v203, 7
  %v205 = vsub.s32 %v202, %v204
  %v206 = vrot.slane %v198, %v205
  %v208 = vunpack.c.l.s4 1966171168
  %v209 = vunpack.c.0.s8 %v208
  %v210 = vlaneseq
  %v211 = vshrl.u32 %v210, 7
  %v212 = vsub.s32 %v209, %v211
  %v213 = vrot.slane %v199, %v212
  %v216 = vsel %vm146, %v213, 0
  %218 = vmatprep.subr.bf16.mxu0 0
  %219 = vmatpush1.bf16.msra.mxu0 %v129
  %220 = vmatprep.subr.bf16.mxu0 0
  %221 = vmatpush1.bf16.msra.mxu0 %v128
  %222 = vmatprep.subr.bf16.mxu0 0
  %223 = vmatpush1.bf16.msra.mxu0 %v127
  %224 = vmatprep.subr.bf16.mxu0 0
  %225 = vmatpush1.bf16.msra.mxu0 %v126
  %226 = vmatprep.subr.bf16.mxu0 0
  %227 = vmatpush1.bf16.msra.mxu0 %v125
  %228 = vmatprep.subr.bf16.mxu0 0
  %229 = vmatpush1.bf16.msra.mxu0 %v124
  %230 = vmatprep.subr.bf16.mxu0 0
  %231 = vmatpush1.bf16.msra.mxu0 %v123
  %232 = vmatprep.subr.bf16.mxu0 0
  %233 = vmatpush1.bf16.msra.mxu0 %v122
  %234 = vmatprep.subr.bf16.mxu0 0
  %235 = vmatpush2.bf16.msra.mxu0 0
  %236 = vmatprep.subr.bf16.mxu0 0
  %237 = vmatpush2.bf16.msra.mxu0 0
  %238 = vmatprep.subr.bf16.mxu0 0
  %239 = vmatpush2.bf16.msra.mxu0 0
  %240 = vmatprep.subr.bf16.mxu0 0
  %241 = vmatpush2.bf16.msra.mxu0 0
  %242 = vmatprep.subr.bf16.mxu0 0
  %243 = vmatpush2.bf16.msra.mxu0 %v133
  %244 = vmatprep.subr.bf16.mxu0 0
  %245 = vmatpush2.bf16.msra.mxu0 %v132
  %246 = vmatprep.subr.bf16.mxu0 0
  %247 = vmatpush2.bf16.msra.mxu0 %v131
  %248 = vmatprep.subr.bf16.mxu0 0
  %249 = vmatpush2.bf16.msra.mxu0 %v130
  %250 = vmatprep.mubr.bf16.mxu0 %v216
  %251 = vmatmul.mubr.bf16.gmra.mxu0 %v206
  %v252 = vpop.f32.mrf.mxu0
  %v253 = vadd.f32 %v48, %v252
  %v254 = vpop.f32.mrf.mxu0
  %v255 = vpop.f32.mrf.mxu0
  %v256 = vpop.f32.mrf.mxu0
  %257 = vdwg.mxu0
  %v258 = vmax.f32 %v185, %v253
  %v259 = vmax.f32 %v258, 0.0
  %v260 = vpack.c.bf16 %v259, %v259
  %vm261 = vcmask 516096
  %262 = vst.msk [vmem:[%s4] sm:$0x1] %vm261, %v260
  // Predicated region
  $region18: #{wdcnn2_forward.10} parent=0 // pred_check
    _
  $region19: #{wdcnn2_forward.10} parent=0 // pred_check_branch
    %264 = sbr.rel (0) target = $region21
  $region20: #{wdcnn2_forward.10} parent=0 // pred_region
    _
  $region21: #{wdcnn2_forward.10} parent=0 // pred_fallthru
    _
  // Predicated region
  $region22: #{wdcnn2_forward.10} parent=0 // pred_check
    _
  $region23: #{wdcnn2_forward.10} parent=0 // pred_check_branch
    %266 = sbr.rel (0) target = $region25
  $region24: #{wdcnn2_forward.10} parent=0 // pred_region
    _
  $region25: #{wdcnn2_forward.10} parent=0 // pred_fallthru
    _

// kernel: wdcnn2_forward.11
$region0: #{wdcnn2_forward.11}
  #allocation0 [shape = 'u32[]', space=smem, size = 0x4, offset = 0x4, fixed_abs, tag = 'smem constant byte address 0x4 - core index']
  #allocation1 [shape = 'u32[144,128]{1,0:T(1,128)}', space=vmem, size = 0x12000, scoped, tag = 'internal scratch']
  %s0 = inlined_call_operand.vmem [shape: bf16[2,64], index: 0, kind: input, shape index: {}]
  %s1 = inlined_call_operand.vmem [shape: bf16[64,100], index: 1, kind: input, shape index: {}]
  %s2 = inlined_call_operand.vmem [shape: f32[1,100], index: 2, kind: input, shape index: {}]
  %s3 = inlined_call_operand.vmem [shape: bf16[100,100], index: 3, kind: input, shape index: {}]
  %s4 = inlined_call_operand.vmem [shape: f32[1,100], index: 4, kind: input, shape index: {}]
  %s5 = inlined_call_operand.vmem [shape: bf16[100,10], index: 5, kind: input, shape index: {}]
  %s6 = inlined_call_operand.vmem [shape: f32[1,10], index: 6, kind: input, shape index: {}]
  %s7 = inlined_call_operand.vmem [shape: bf16[100,100], index: 7, kind: input, shape index: {}]
  %s8 = inlined_call_operand.vmem [shape: f32[1,100], index: 8, kind: input, shape index: {}]
  %s9 = inlined_call_operand.vmem [shape: bf16[100,2], index: 9, kind: input, shape index: {}]
  %s10 = inlined_call_operand.vmem [shape: f32[1,2], index: 10, kind: input, shape index: {}]
  %s11 = inlined_call_operand.hbm [shape: f32[2,10], index: 11, kind: output, shape index: {0}]
  %s12 = inlined_call_operand.hbm [shape: f32[2,2], index: 12, kind: output, shape index: {1}]
  %13 = xla_tuple %s11, %s12
  %s14 = sld [smem:[#allocation0]]
  $region62: #{wdcnn2_forward.11} parent=0
    _
  %s16 = ssub.s32 1, %s14
  %s17 = scalar_select 0, %s16, %s14
  $region1: #{wdcnn2_forward.11} parent=0
    #allocation2 [shape = 'u8[1024]{0}', space=vmem, size = 0x400, scoped, tag = 'output window, operand 0, single buffered']
    #allocation3 [shape = 's32[1]{0}', space=sflag, size = 0x4, scoped, tag = 'scoped memory for wdcnn2_forward.11']
    #allocation4 [shape = 'u8[1024]{0}', space=vmem, size = 0x400, scoped, tag = 'output window, operand 1, single buffered']
    #allocation5 [shape = 's32[1]{0}', space=sflag, size = 0x4, scoped, tag = 'scoped memory for wdcnn2_forward.11']
    %18 = vsyncpa [#allocation3], 0
    %19 = vsyncpa [#allocation5], 0
    // Predicated region
    $region2: #{wdcnn2_forward.11} parent=1 // pred_check
      _
    $region3: #{wdcnn2_forward.11} parent=1 // pred_check_branch
      %21 = sbr.rel (0) target = $region5
    $region4: #{wdcnn2_forward.11} parent=1 // pred_region
      _
    $region5: #{wdcnn2_forward.11} parent=1 // pred_fallthru
      _
    // Predicated region
    $region6: #{wdcnn2_forward.11} parent=1 // pred_check
      _
    $region7: #{wdcnn2_forward.11} parent=1 // pred_check_branch
      %23 = sbr.rel (0) target = $region9
    $region8: #{wdcnn2_forward.11} parent=1 // pred_region
      _
    $region9: #{wdcnn2_forward.11} parent=1 // pred_fallthru
      _
    // Predicated region
    $region10: #{wdcnn2_forward.11} parent=1 // pred_check
      _
    $region11: #{wdcnn2_forward.11} parent=1 // pred_check_branch
      %25 = sbr.rel (0) target = $region13
    $region12: #{wdcnn2_forward.11} parent=1 // pred_region
      _
    $region13: #{wdcnn2_forward.11} parent=1 // pred_fallthru
      _
    // Predicated region
    $region14: #{wdcnn2_forward.11} parent=1 // pred_check
      _
    $region15: #{wdcnn2_forward.11} parent=1 // pred_check_branch
      %27 = sbr.rel (0) target = $region17
    $region16: #{wdcnn2_forward.11} parent=1 // pred_region
      _
    $region17: #{wdcnn2_forward.11} parent=1 // pred_fallthru
      _
    // Predicated region
    $region18: #{wdcnn2_forward.11} parent=1 // pred_check
      _
    $region19: #{wdcnn2_forward.11} parent=1 // pred_check_branch
      %29 = sbr.rel (0) target = $region21
    $region20: #{wdcnn2_forward.11} parent=1 // pred_region
      _
    $region21: #{wdcnn2_forward.11} parent=1 // pred_fallthru
      _
    // Predicated region
    $region22: #{wdcnn2_forward.11} parent=1 // pred_check
      _
    $region23: #{wdcnn2_forward.11} parent=1 // pred_check_branch
      %31 = sbr.rel (0) target = $region25
    $region24: #{wdcnn2_forward.11} parent=1 // pred_region
      _
    $region25: #{wdcnn2_forward.11} parent=1 // pred_fallthru
      _
    // Predicated region
    $region26: #{wdcnn2_forward.11} parent=1 // pred_check
      _
    $region27: #{wdcnn2_forward.11} parent=1 // pred_check_branch
      %33 = sbr.rel (0) target = $region29
    $region28: #{wdcnn2_forward.11} parent=1 // pred_region
      _
    $region29: #{wdcnn2_forward.11} parent=1 // pred_fallthru
      _
    // Predicated region
    $region30: #{wdcnn2_forward.11} parent=1 // pred_check
      _
    $region31: #{wdcnn2_forward.11} parent=1 // pred_check_branch
      %35 = sbr.rel (0) target = $region33
    $region32: #{wdcnn2_forward.11} parent=1 // pred_region
      _
    $region33: #{wdcnn2_forward.11} parent=1 // pred_fallthru
      _
    // Predicated region
    $region34: #{wdcnn2_forward.11} parent=1 // pred_check
      _
    $region35: #{wdcnn2_forward.11} parent=1 // pred_check_branch
      %37 = sbr.rel (0) target = $region37
    $region36: #{wdcnn2_forward.11} parent=1 // pred_region
      _
    $region37: #{wdcnn2_forward.11} parent=1 // pred_fallthru
      _
    // Predicated region
    $region38: #{wdcnn2_forward.11} parent=1 // pred_check
      _
    $region39: #{wdcnn2_forward.11} parent=1 // pred_check_branch
      %39 = sbr.rel (0) target = $region41
    $region40: #{wdcnn2_forward.11} parent=1 // pred_region
      _
    $region41: #{wdcnn2_forward.11} parent=1 // pred_fallthru
      _
    // Predicated region
    $region42: #{wdcnn2_forward.11} parent=1 // pred_check
      _
    $region43: #{wdcnn2_forward.11} parent=1 // pred_check_branch
      %41 = sbr.rel (0) target = $region45
    $region44: #{wdcnn2_forward.11} parent=1 // pred_region
      _
    $region45: #{wdcnn2_forward.11} parent=1 // pred_fallthru
      _
    %v43 = vld [vmem:[%s0] sm:$0x1]
    %v44 = vld [vmem:[%s1] sm:$0xf]
    %v45 = vld [vmem:[%s1 + $0x4] sm:$0xf]
    %v46 = vld [vmem:[%s1 + $0x8] sm:$0xf]
    %v47 = vld [vmem:[%s1 + $0xc] sm:$0xf]
    %v48 = vld [vmem:[%s1 + $0x10] sm:$0xf]
    %v49 = vld [vmem:[%s1 + $0x14] sm:$0xf]
    %v50 = vld [vmem:[%s1 + $0x18] sm:$0xf]
    %v51 = vld [vmem:[%s1 + $0x1c] sm:$0xf]
    %v52 = vld [vmem:[%s2] sm:$0x1]
    %v54 = vlaneseq
    %v55 = vshrl.u32 %v54, 7
    %v56 = vsub.s32 0, %v55
    %v57 = vrot.slane %v52, %v56
    %v67 = vunpack.c.l.b16 %v44
    %v68 = vunpack.c.l.b16 %v45
    %v69 = vunpack.c.l.b16 %v46
    %v70 = vunpack.c.l.b16 %v47
    %v71 = vunpack.c.l.b16 %v48
    %v72 = vunpack.c.l.b16 %v49
    %v73 = vunpack.c.l.b16 %v50
    %v74 = vunpack.c.l.b16 %v51
    %v75 = vpack.c.b16 %v68, %v67
    %v76 = vpack.c.b16 %v70, %v69
    %v77 = vpack.c.b16 %v72, %v71
    %v78 = vpack.c.b16 %v74, %v73
    %vm83 = vcmask 523264
    %v85 = vsel %vm83, %v43, 0
    %87 = vmatprep.subr.bf16.mxu0 0
    %88 = vmatpush1.bf16.msra.mxu0 0
    %89 = vmatprep.subr.bf16.mxu0 0
    %90 = vmatpush1.bf16.msra.mxu0 0
    %91 = vmatprep.subr.bf16.mxu0 0
    %92 = vmatpush1.bf16.msra.mxu0 0
    %93 = vmatprep.subr.bf16.mxu0 0
    %94 = vmatpush1.bf16.msra.mxu0 0
    %95 = vmatprep.subr.bf16.mxu0 0
    %96 = vmatpush1.bf16.msra.mxu0 %v78
    %97 = vmatprep.subr.bf16.mxu0 0
    %98 = vmatpush1.bf16.msra.mxu0 %v77
    %99 = vmatprep.subr.bf16.mxu0 0
    %100 = vmatpush1.bf16.msra.mxu0 %v76
    %101 = vmatprep.subr.bf16.mxu0 0
    %102 = vmatpush1.bf16.msra.mxu0 %v75
    %103 = vmatprep.subr.bf16.mxu0 0
    %104 = vmatpush2.bf16.msra.mxu0 0
    %105 = vmatprep.subr.bf16.mxu0 0
    %106 = vmatpush2.bf16.msra.mxu0 0
    %107 = vmatprep.subr.bf16.mxu0 0
    %108 = vmatpush2.bf16.msra.mxu0 0
    %109 = vmatprep.subr.bf16.mxu0 0
    %110 = vmatpush2.bf16.msra.mxu0 0
    %111 = vmatprep.subr.bf16.mxu0 0
    %112 = vmatpush2.bf16.msra.mxu0 0
    %113 = vmatprep.subr.bf16.mxu0 0
    %114 = vmatpush2.bf16.msra.mxu0 0
    %115 = vmatprep.subr.bf16.mxu0 0
    %116 = vmatpush2.bf16.msra.mxu0 0
    %117 = vmatprep.subr.bf16.mxu0 0
    %118 = vmatpush2.bf16.msra.mxu0 0
    %119 = vmatprep.mubr.bf16.mxu0 0
    %120 = vmatmul.mubr.bf16.gmra.mxu0 %v85
    %v121 = vpop.f32.mrf.mxu0
    %v122 = vadd.f32 %v57, %v121
    %v123 = vpop.f32.mrf.mxu0
    %v124 = vpop.f32.mrf.mxu0
    %v125 = vpop.f32.mrf.mxu0
    %126 = vdwg.mxu0
    %v127 = vmax.f32 %v122, 0.0
    %v128 = vpack.c.bf16 %v127, %v127
    %v129 = vld [vmem:[%s3] sm:$0xf]
    %v130 = vld [vmem:[%s3 + $0x4] sm:$0xf]
    %v131 = vld [vmem:[%s3 + $0x8] sm:$0xf]
    %v132 = vld [vmem:[%s3 + $0xc] sm:$0xf]
    %v133 = vld [vmem:[%s3 + $0x10] sm:$0xf]
    %v134 = vld [vmem:[%s3 + $0x14] sm:$0xf]
    %v135 = vld [vmem:[%s3 + $0x18] sm:$0xf]
    %v136 = vld [vmem:[%s3 + $0x1c] sm:$0xf]
    %v137 = vld [vmem:[%s3 + $0x20] sm:$0xf]
    %v138 = vld [vmem:[%s3 + $0x24] sm:$0xf]
    %v139 = vld [vmem:[%s3 + $0x28] sm:$0xf]
    %v140 = vld [vmem:[%s3 + $0x2c] sm:$0xf]
    %v141 = vld [vmem:[%s3 + $0x30] sm:$0x3]
    %v142 = vld [vmem:[%s4] sm:$0x1]
    %v144 = vlaneseq
    %v145 = vshrl.u32 %v144, 7
    %v146 = vsub.s32 0, %v145
    %v147 = vrot.slane %v142, %v146
    %v162 = vunpack.c.l.b16 %v129
    %v163 = vunpack.c.l.b16 %v130
    %v164 = vunpack.c.l.b16 %v131
    %v165 = vunpack.c.l.b16 %v132
    %v166 = vunpack.c.l.b16 %v133
    %v167 = vunpack.c.l.b16 %v134
    %v168 = vunpack.c.l.b16 %v135
    %v169 = vunpack.c.l.b16 %v136
    %v170 = vunpack.c.l.b16 %v137
    %v171 = vunpack.c.l.b16 %v138
    %v172 = vunpack.c.l.b16 %v139
    %v173 = vunpack.c.l.b16 %v140
    %v174 = vunpack.c.l.b16 %v141
    %v175 = vpack.c.b16 %v163, %v162
    %v176 = vpack.c.b16 %v165, %v164
    %v177 = vpack.c.b16 %v167, %v166
    %v178 = vpack.c.b16 %v169, %v168
    %v179 = vpack.c.b16 %v171, %v170
    %v180 = vpack.c.b16 %v173, %v172
    %v181 = vpack.c.b16 %v174, %v174
    %vm188 = vcmask 818176
    %v190 = vsel %vm188, %v128, 0
    %vm192 = vcmask 1041408
    %v194 = vsel %vm192, %v181, 0
    %196 = vmatprep.subr.bf16.mxu0 0
    %197 = vmatpush1.bf16.msra.mxu0 0
    %198 = vmatprep.subr.bf16.mxu0 0
    %199 = vmatpush1.bf16.msra.mxu0 %v194
    %200 = vmatprep.subr.bf16.mxu0 0
    %201 = vmatpush1.bf16.msra.mxu0 %v180
    %202 = vmatprep.subr.bf16.mxu0 0
    %203 = vmatpush1.bf16.msra.mxu0 %v179
    %204 = vmatprep.subr.bf16.mxu0 0
    %205 = vmatpush1.bf16.msra.mxu0 %v178
    %206 = vmatprep.subr.bf16.mxu0 0
    %207 = vmatpush1.bf16.msra.mxu0 %v177
    %208 = vmatprep.subr.bf16.mxu0 0
    %209 = vmatpush1.bf16.msra.mxu0 %v176
    %210 = vmatprep.subr.bf16.mxu0 0
    %211 = vmatpush1.bf16.msra.mxu0 %v175
    %212 = vmatprep.subr.bf16.mxu0 0
    %213 = vmatpush2.bf16.msra.mxu0 0
    %214 = vmatprep.subr.bf16.mxu0 0
    %215 = vmatpush2.bf16.msra.mxu0 0
    %216 = vmatprep.subr.bf16.mxu0 0
    %217 = vmatpush2.bf16.msra.mxu0 0
    %218 = vmatprep.subr.bf16.mxu0 0
    %219 = vmatpush2.bf16.msra.mxu0 0
    %220 = vmatprep.subr.bf16.mxu0 0
    %221 = vmatpush2.bf16.msra.mxu0 0
    %222 = vmatprep.subr.bf16.mxu0 0
    %223 = vmatpush2.bf16.msra.mxu0 0
    %224 = vmatprep.subr.bf16.mxu0 0
    %225 = vmatpush2.bf16.msra.mxu0 0
    %226 = vmatprep.subr.bf16.mxu0 0
    %227 = vmatpush2.bf16.msra.mxu0 0
    %228 = vmatprep.mubr.bf16.mxu0 0
    %229 = vmatmul.mubr.bf16.gmra.mxu0 %v190
    %v230 = vpop.f32.mrf.mxu0
    %v231 = vadd.f32 %v147, %v230
    %v232 = vpop.f32.mrf.mxu0
    %v233 = vpop.f32.mrf.mxu0
    %v234 = vpop.f32.mrf.mxu0
    %235 = vdwg.mxu0
    %v236 = vmax.f32 %v231, 0.0
    %v237 = vpack.c.bf16 %v236, %v236
    %v238 = vld [vmem:[%s5] sm:$0xf]
    %v239 = vld [vmem:[%s5 + $0x4] sm:$0xf]
    %v240 = vld [vmem:[%s5 + $0x8] sm:$0xf]
    %v241 = vld [vmem:[%s5 + $0xc] sm:$0xf]
    %v242 = vld [vmem:[%s5 + $0x10] sm:$0xf]
    %v243 = vld [vmem:[%s5 + $0x14] sm:$0xf]
    %v244 = vld [vmem:[%s5 + $0x18] sm:$0xf]
    %v245 = vld [vmem:[%s5 + $0x1c] sm:$0xf]
    %v246 = vld [vmem:[%s5 + $0x20] sm:$0xf]
    %v247 = vld [vmem:[%s5 + $0x24] sm:$0xf]
    %v248 = vld [vmem:[%s5 + $0x28] sm:$0xf]
    %v249 = vld [vmem:[%s5 + $0x2c] sm:$0xf]
    %v250 = vld [vmem:[%s5 + $0x30] sm:$0x3]
    %v251 = vld [vmem:[%s6] sm:$0x1]
    %v253 = vlaneseq
    %v254 = vshrl.u32 %v253, 7
    %v255 = vsub.s32 0, %v254
    %v256 = vrot.slane %v251, %v255
    %v271 = vunpack.c.l.b16 %v238
    %v272 = vunpack.c.l.b16 %v239
    %v273 = vunpack.c.l.b16 %v240
    %v274 = vunpack.c.l.b16 %v241
    %v275 = vunpack.c.l.b16 %v242
    %v276 = vunpack.c.l.b16 %v243
    %v277 = vunpack.c.l.b16 %v244
    %v278 = vunpack.c.l.b16 %v245
    %v279 = vunpack.c.l.b16 %v246
    %v280 = vunpack.c.l.b16 %v247
    %v281 = vunpack.c.l.b16 %v248
    %v282 = vunpack.c.l.b16 %v249
    %v283 = vunpack.c.l.b16 %v250
    %v284 = vpack.c.b16 %v272, %v271
    %v285 = vpack.c.b16 %v274, %v273
    %v286 = vpack.c.b16 %v276, %v275
    %v287 = vpack.c.b16 %v278, %v277
    %v288 = vpack.c.b16 %v280, %v279
    %v289 = vpack.c.b16 %v282, %v281
    %v290 = vpack.c.b16 %v283, %v283
    %v298 = vsel %vm188, %v237, 0
    %v301 = vsel %vm192, %v290, 0
    %303 = vmatprep.subr.bf16.mxu0 0
    %304 = vmatpush1.bf16.msra.mxu0 0
    %305 = vmatprep.subr.bf16.mxu0 0
    %306 = vmatpush1.bf16.msra.mxu0 %v301
    %307 = vmatprep.subr.bf16.mxu0 0
    %308 = vmatpush1.bf16.msra.mxu0 %v289
    %309 = vmatprep.subr.bf16.mxu0 0
    %310 = vmatpush1.bf16.msra.mxu0 %v288
    %311 = vmatprep.subr.bf16.mxu0 0
    %312 = vmatpush1.bf16.msra.mxu0 %v287
    %313 = vmatprep.subr.bf16.mxu0 0
    %314 = vmatpush1.bf16.msra.mxu0 %v286
    %315 = vmatprep.subr.bf16.mxu0 0
    %316 = vmatpush1.bf16.msra.mxu0 %v285
    %317 = vmatprep.subr.bf16.mxu0 0
    %318 = vmatpush1.bf16.msra.mxu0 %v284
    %319 = vmatprep.subr.bf16.mxu0 0
    %320 = vmatpush2.bf16.msra.mxu0 0
    %321 = vmatprep.subr.bf16.mxu0 0
    %322 = vmatpush2.bf16.msra.mxu0 0
    %323 = vmatprep.subr.bf16.mxu0 0
    %324 = vmatpush2.bf16.msra.mxu0 0
    %325 = vmatprep.subr.bf16.mxu0 0
    %326 = vmatpush2.bf16.msra.mxu0 0
    %327 = vmatprep.subr.bf16.mxu0 0
    %328 = vmatpush2.bf16.msra.mxu0 0
    %329 = vmatprep.subr.bf16.mxu0 0
    %330 = vmatpush2.bf16.msra.mxu0 0
    %331 = vmatprep.subr.bf16.mxu0 0
    %332 = vmatpush2.bf16.msra.mxu0 0
    %333 = vmatprep.subr.bf16.mxu0 0
    %334 = vmatpush2.bf16.msra.mxu0 0
    %335 = vmatprep.mubr.bf16.mxu0 0
    %336 = vmatmul.mubr.bf16.gmra.mxu0 %v298
    %v337 = vpop.f32.mrf.mxu0
    %v338 = vadd.f32 %v256, %v337
    %v339 = vpop.f32.mrf.mxu0
    %v340 = vpop.f32.mrf.mxu0
    %v341 = vpop.f32.mrf.mxu0
    %342 = vdwg.mxu0
    %vm343 = vcmask 74752
    %v344 = vsel %vm343, %v338, -inf
    %345 = vmax.xlane.f32.xlu0 %v344
    %v346 = vpop.xlane.xlu0 %345
    %v347 = vsub.f32 %v338, %v346
    %v348 = vmul.f32 %v347, 1.442695
    %v349 = vpow.pop %v348
    %v350 = vsel %vm343, %v349, 0.0
    %351 = vadd.xlane.f32.xlu0 %v350
    %v352 = vpop.xlane.xlu0 %351
    %v353 = vrcp.pop %v352
    %v354 = vmul.f32 %v349, %v353
    %355 = vst.msk [vmem:[#allocation2] sm:$0x3] %vm343, %v354
    %v356 = vld [vmem:[%s7] sm:$0xf]
    %v357 = vld [vmem:[%s7 + $0x4] sm:$0xf]
    %v358 = vld [vmem:[%s7 + $0x8] sm:$0xf]
    %v359 = vld [vmem:[%s7 + $0xc] sm:$0xf]
    %v360 = vld [vmem:[%s7 + $0x10] sm:$0xf]
    %v361 = vld [vmem:[%s7 + $0x14] sm:$0xf]
    %v362 = vld [vmem:[%s7 + $0x18] sm:$0xf]
    %v363 = vld [vmem:[%s7 + $0x1c] sm:$0xf]
    %v364 = vld [vmem:[%s7 + $0x20] sm:$0xf]
    %v365 = vld [vmem:[%s7 + $0x24] sm:$0xf]
    %v366 = vld [vmem:[%s7 + $0x28] sm:$0xf]
    %v367 = vld [vmem:[%s7 + $0x2c] sm:$0xf]
    %v368 = vld [vmem:[%s7 + $0x30] sm:$0x3]
    %v369 = vld [vmem:[%s8] sm:$0x1]
    %v371 = vlaneseq
    %v372 = vshrl.u32 %v371, 7
    %v373 = vsub.s32 0, %v372
    %v374 = vrot.slane %v369, %v373
    %v389 = vunpack.c.l.b16 %v356
    %v390 = vunpack.c.l.b16 %v357
    %v391 = vunpack.c.l.b16 %v358
    %v392 = vunpack.c.l.b16 %v359
    %v393 = vunpack.c.l.b16 %v360
    %v394 = vunpack.c.l.b16 %v361
    %v395 = vunpack.c.l.b16 %v362
    %v396 = vunpack.c.l.b16 %v363
    %v397 = vunpack.c.l.b16 %v364
    %v398 = vunpack.c.l.b16 %v365
    %v399 = vunpack.c.l.b16 %v366
    %v400 = vunpack.c.l.b16 %v367
    %v401 = vunpack.c.l.b16 %v368
    %v402 = vpack.c.b16 %v390, %v389
    %v403 = vpack.c.b16 %v392, %v391
    %v404 = vpack.c.b16 %v394, %v393
    %v405 = vpack.c.b16 %v396, %v395
    %v406 = vpack.c.b16 %v398, %v397
    %v407 = vpack.c.b16 %v400, %v399
    %v408 = vpack.c.b16 %v401, %v401
    %v416 = vsel %vm192, %v408, 0
    %418 = vmatprep.subr.bf16.mxu0 0
    %419 = vmatpush1.bf16.msra.mxu0 0
    %420 = vmatprep.subr.bf16.mxu0 0
    %421 = vmatpush1.bf16.msra.mxu0 %v416
    %422 = vmatprep.subr.bf16.mxu0 0
    %423 = vmatpush1.bf16.msra.mxu0 %v407
    %424 = vmatprep.subr.bf16.mxu0 0
    %425 = vmatpush1.bf16.msra.mxu0 %v406
    %426 = vmatprep.subr.bf16.mxu0 0
    %427 = vmatpush1.bf16.msra.mxu0 %v405
    %428 = vmatprep.subr.bf16.mxu0 0
    %429 = vmatpush1.bf16.msra.mxu0 %v404
    %430 = vmatprep.subr.bf16.mxu0 0
    %431 = vmatpush1.bf16.msra.mxu0 %v403
    %432 = vmatprep.subr.bf16.mxu0 0
    %433 = vmatpush1.bf16.msra.mxu0 %v402
    %434 = vmatprep.subr.bf16.mxu0 0
    %435 = vmatpush2.bf16.msra.mxu0 0
    %436 = vmatprep.subr.bf16.mxu0 0
    %437 = vmatpush2.bf16.msra.mxu0 0
    %438 = vmatprep.subr.bf16.mxu0 0
    %439 = vmatpush2.bf16.msra.mxu0 0
    %440 = vmatprep.subr.bf16.mxu0 0
    %441 = vmatpush2.bf16.msra.mxu0 0
    %442 = vmatprep.subr.bf16.mxu0 0
    %443 = vmatpush2.bf16.msra.mxu0 0
    %444 = vmatprep.subr.bf16.mxu0 0
    %445 = vmatpush2.bf16.msra.mxu0 0
    %446 = vmatprep.subr.bf16.mxu0 0
    %447 = vmatpush2.bf16.msra.mxu0 0
    %448 = vmatprep.subr.bf16.mxu0 0
    %449 = vmatpush2.bf16.msra.mxu0 0
    %450 = vmatprep.mubr.bf16.mxu0 0
    %451 = vmatmul.mubr.bf16.gmra.mxu0 %v298
    %v452 = vpop.f32.mrf.mxu0
    %v453 = vadd.f32 %v374, %v452
    %v454 = vpop.f32.mrf.mxu0
    %v455 = vpop.f32.mrf.mxu0
    %v456 = vpop.f32.mrf.mxu0
    %457 = vdwg.mxu0
    %vm458 = vcmp.ge.f32.partialorder %v453, 0.0
    %v459 = vmul.f32 %v453, 0.01
    %v460 = vsel %vm458, %v453, %v459
    %v461 = vpack.c.bf16 %v460, %v460
    %v462 = vld [vmem:[%s9] sm:$0xf]
    %v463 = vld [vmem:[%s9 + $0x4] sm:$0xf]
    %v464 = vld [vmem:[%s9 + $0x8] sm:$0xf]
    %v465 = vld [vmem:[%s9 + $0xc] sm:$0xf]
    %v466 = vld [vmem:[%s9 + $0x10] sm:$0xf]
    %v467 = vld [vmem:[%s9 + $0x14] sm:$0xf]
    %v468 = vld [vmem:[%s9 + $0x18] sm:$0xf]
    %v469 = vld [vmem:[%s9 + $0x1c] sm:$0xf]
    %v470 = vld [vmem:[%s9 + $0x20] sm:$0xf]
    %v471 = vld [vmem:[%s9 + $0x24] sm:$0xf]
    %v472 = vld [vmem:[%s9 + $0x28] sm:$0xf]
    %v473 = vld [vmem:[%s9 + $0x2c] sm:$0xf]
    %v474 = vld [vmem:[%s9 + $0x30] sm:$0x3]
    %v475 = vld [vmem:[%s10] sm:$0x1]
    %v477 = vlaneseq
    %v478 = vshrl.u32 %v477, 7
    %v479 = vsub.s32 0, %v478
    %v480 = vrot.slane %v475, %v479
    %v495 = vunpack.c.l.b16 %v462
    %v496 = vunpack.c.l.b16 %v463
    %v497 = vunpack.c.l.b16 %v464
    %v498 = vunpack.c.l.b16 %v465
    %v499 = vunpack.c.l.b16 %v466
    %v500 = vunpack.c.l.b16 %v467
    %v501 = vunpack.c.l.b16 %v468
    %v502 = vunpack.c.l.b16 %v469
    %v503 = vunpack.c.l.b16 %v470
    %v504 = vunpack.c.l.b16 %v471
    %v505 = vunpack.c.l.b16 %v472
    %v506 = vunpack.c.l.b16 %v473
    %v507 = vunpack.c.l.b16 %v474
    %v508 = vpack.c.b16 %v496, %v495
    %v509 = vpack.c.b16 %v498, %v497
    %v510 = vpack.c.b16 %v500, %v499
    %v511 = vpack.c.b16 %v502, %v501
    %v512 = vpack.c.b16 %v504, %v503
    %v513 = vpack.c.b16 %v506, %v505
    %v514 = vpack.c.b16 %v507, %v507
    %v522 = vsel %vm188, %v461, 0
    %v525 = vsel %vm192, %v514, 0
    %527 = vmatprep.subr.bf16.mxu0 0
    %528 = vmatpush1.bf16.msra.mxu0 0
    %529 = vmatprep.subr.bf16.mxu0 0
    %530 = vmatpush1.bf16.msra.mxu0 %v525
    %531 = vmatprep.subr.bf16.mxu0 0
    %532 = vmatpush1.bf16.msra.mxu0 %v513
    %533 = vmatprep.subr.bf16.mxu0 0
    %534 = vmatpush1.bf16.msra.mxu0 %v512
    %535 = vmatprep.subr.bf16.mxu0 0
    %536 = vmatpush1.bf16.msra.mxu0 %v511
    %537 = vmatprep.subr.bf16.mxu0 0
    %538 = vmatpush1.bf16.msra.mxu0 %v510
    %539 = vmatprep.subr.bf16.mxu0 0
    %540 = vmatpush1.bf16.msra.mxu0 %v509
    %541 = vmatprep.subr.bf16.mxu0 0
    %542 = vmatpush1.bf16.msra.mxu0 %v508
    %543 = vmatprep.subr.bf16.mxu0 0
    %544 = vmatpush2.bf16.msra.mxu0 0
    %545 = vmatprep.subr.bf16.mxu0 0
    %546 = vmatpush2.bf16.msra.mxu0 0
    %547 = vmatprep.subr.bf16.mxu0 0
    %548 = vmatpush2.bf16.msra.mxu0 0
    %549 = vmatprep.subr.bf16.mxu0 0
    %550 = vmatpush2.bf16.msra.mxu0 0
    %551 = vmatprep.subr.bf16.mxu0 0
    %552 = vmatpush2.bf16.msra.mxu0 0
    %553 = vmatprep.subr.bf16.mxu0 0
    %554 = vmatpush2.bf16.msra.mxu0 0
    %555 = vmatprep.subr.bf16.mxu0 0
    %556 = vmatpush2.bf16.msra.mxu0 0
    %557 = vmatprep.subr.bf16.mxu0 0
    %558 = vmatpush2.bf16.msra.mxu0 0
    %559 = vmatprep.mubr.bf16.mxu0 0
    %560 = vmatmul.mubr.bf16.gmra.mxu0 %v522
    %v561 = vpop.f32.mrf.mxu0
    %v562 = vadd.f32 %v480, %v561
    %v563 = vpop.f32.mrf.mxu0
    %v564 = vpop.f32.mrf.mxu0
    %v565 = vpop.f32.mrf.mxu0
    %566 = vdwg.mxu0
    %vm567 = vcmask 9216
    %v568 = vsel %vm567, %v562, -inf
    %569 = vmax.xlane.f32.xlu0 %v568
    %v570 = vpop.xlane.xlu0 %569
    %v571 = vsub.f32 %v562, %v570
    %v572 = vmul.f32 %v571, 1.442695
    %v573 = vpow.pop %v572
    %v574 = vsel %vm567, %v573, 0.0
    %575 = vadd.xlane.f32.xlu0 %v574
    %v576 = vpop.xlane.xlu0 %575
    %v577 = vrcp.pop %v576
    %v578 = vmul.f32 %v573, %v577
    %579 = vst.msk [vmem:[#allocation4] sm:$0x3] %vm567, %v578
    // Predicated region
    $region46: #{wdcnn2_forward.11} parent=1 // pred_check
      _
    $region47: #{wdcnn2_forward.11} parent=1 // pred_check_branch
      %581 = sbr.rel (0) target = $region49
    $region48: #{wdcnn2_forward.11} parent=1 // pred_region
      %s583 = ssub.s32 32, 32
      %584 = vsyncadd [#allocation3], %s583
      %s586 = sshll.u32 [#allocation2], 4
      %s587 = int_to_ptr.vmem [resolvable:$true] %s586
      %589 = dma.vmem_to_hbm [thread:$0]  %s587, 32, %s11, [#allocation3]
    $region49: #{wdcnn2_forward.11} parent=1 // pred_fallthru
      _
    // Predicated region
    $region50: #{wdcnn2_forward.11} parent=1 // pred_check
      _
    $region51: #{wdcnn2_forward.11} parent=1 // pred_check_branch
      %591 = sbr.rel (0) target = $region53
    $region52: #{wdcnn2_forward.11} parent=1 // pred_region
      %s593 = ssub.s32 32, 32
      %594 = vsyncadd [#allocation5], %s593
      %s596 = sshll.u32 [#allocation4], 4
      %s597 = int_to_ptr.vmem [resolvable:$true] %s596
      %599 = dma.vmem_to_hbm [thread:$0]  %s597, 32, %s12, [#allocation5]
    $region53: #{wdcnn2_forward.11} parent=1 // pred_fallthru
      _
    // Predicated region
    $region54: #{wdcnn2_forward.11} parent=1 // pred_check
      _
    $region55: #{wdcnn2_forward.11} parent=1 // pred_check_branch
      %601 = sbr.rel (0) target = $region57
    $region56: #{wdcnn2_forward.11} parent=1 // pred_region
      %602 = dma.done [#allocation3], 32
    $region57: #{wdcnn2_forward.11} parent=1 // pred_fallthru
      _
    // Predicated region
    $region58: #{wdcnn2_forward.11} parent=1 // pred_check
      _
    $region59: #{wdcnn2_forward.11} parent=1 // pred_check_branch
      %604 = sbr.rel (0) target = $region61
    $region60: #{wdcnn2_forward.11} parent=1 // pred_region
      %605 = dma.done [#allocation5], 32
    $region61: #{wdcnn2_forward.11} parent=1 // pred_fallthru
      _
    %606 = vsyncpa [#allocation3], 1
    %607 = vsyncpa [#allocation5], 1

</llo_original>
